<compile_context>
chip_gen: v7x
topology: tpu7x:2x2x1
jax: 0.10.0
libtpu: 0.0.40
codegen_flags: <defaults>
</compile_context>

<pallas_src>
import functools

import jax
import jax.numpy as jnp
import numpy as np
from jax.experimental import pallas as pl
from jax.experimental.pallas import tpu as pltpu

EPS = 1e-5


def _full_spec(shape):
    # one grid step, whole array resident in VMEM
    return pl.BlockSpec(tuple(shape), lambda i: (0,) * len(shape))


# --------------------------------------------------------------------------
# single fused kernel
# --------------------------------------------------------------------------
def fused_block_kernel(*refs, n, ho, wo, cin, cout, k, pad, stride):
    downsample = (stride == 2)
    nx = stride * stride if downsample else 1
    x_refs = refs[:nx]
    w1_ref, g1_ref, b1_ref, w2_ref, g2_ref, b2_ref = refs[nx:nx + 6]
    if downsample:
        wd_ref, bd_ref, o_ref, h1p_ref = refs[nx + 6:nx + 10]
    else:
        o_ref, h1p_ref = refs[nx + 6:nx + 8]
        wd_ref = bd_ref = None

    rows = n * ho * wo
    inv_rows = 1.0 / float(rows)

    def bn(y, gamma, beta):
        # one-pass batch stats (biased variance); fold gamma & rsqrt into a
        # single per-channel scale/shift -> one FMA per element.
        mean = jnp.sum(y, axis=0, keepdims=True) * inv_rows
        ex2 = jnp.sum(y * y, axis=0, keepdims=True) * inv_rows
        var = ex2 - mean * mean
        scale = gamma * jax.lax.rsqrt(var + EPS)        # (1, cout)
        shift = beta - mean * scale                     # (1, cout)
        return y * scale + shift

    # ---- conv1 im2col built in VMEM: tap (kh,kw) is an unstrided static
    #      slice of the padded input (stride==1) or of stride-phase
    #      (kh%2, kw%2) of the padded input (stride==2). --------------------
    xs = [r[...] for r in x_refs]

    def tap1(kh, kw):
        if downsample:
            v = xs[(kh % stride) * stride + (kw % stride)]
            return v[:, kh // stride:kh // stride + ho,
                     kw // stride:kw // stride + wo, :]
        return xs[0][:, kh:kh + ho, kw:kw + wo, :]

    taps1 = [tap1(kh, kw) for kh in range(k) for kw in range(k)]
    p1 = jnp.concatenate(taps1, axis=-1).reshape(rows, k * k * cin)
    c1 = jnp.dot(p1, w1_ref[...], preferred_element_type=jnp.float32)

    # ---- BN1 + ReLU, kept on-chip -----------------------------------------
    h1 = jnp.maximum(bn(c1, g1_ref[...], b1_ref[...]), 0.0)      # (rows, cout)

    # ---- stage h1 into a zero-padded VMEM scratch for conv2's 3x3 window --
    h1p_ref[...] = jnp.zeros_like(h1p_ref)
    h1p_ref[:, pad:pad + ho, pad:pad + wo, :] = h1.reshape(n, ho, wo, cout)
    h1p = h1p_ref[...]

    # ---- conv2 (3x3, stride 1): single im2col MXU matmul -------------------
    taps2 = [h1p[:, kh:kh + ho, kw:kw + wo, :]
             for kh in range(k) for kw in range(k)]
    p2 = jnp.concatenate(taps2, axis=-1).reshape(rows, k * k * cout)
    c2 = jnp.dot(p2, w2_ref[...], preferred_element_type=jnp.float32)

    # ---- BN2 ----------------------------------------------------------------
    y2 = bn(c2, g2_ref[...], b2_ref[...])

    # ---- identity / 1x1 downsample: centre tap (== x at the strided output
    #      positions) read from the already-resident conv1 inputs ------------
    xc = tap1(pad, pad).reshape(rows, cin)
    if downsample:
        idn = jnp.dot(xc, wd_ref[...],
                      preferred_element_type=jnp.float32) + bd_ref[...]
    else:
        idn = xc                                                 # cin == cout

    o_ref[...] = jnp.maximum(y2 + idn, 0.0)


# ------------------------------ wrapper -------------------------------------
def building_block_forward(x_nchw, p, *, stride, kernel=3, padding=1):
    x = jnp.transpose(x_nchw, (0, 2, 3, 1)).astype(jnp.float32)   # NCHW -> NHWC
    n, h, w, cin = x.shape
    k = kernel
    cout = p["w1"].shape[-1]                                      # HWIO weights
    ho = (h + 2 * padding - k) // stride + 1
    wo = (w + 2 * padding - k) // stride + 1
    assert k == 2 * padding + 1, "conv2 same-size output needs kernel == 2*pad+1"
    downsample = (stride == 2)
    if not downsample:
        assert stride == 1 and cin == cout, \
            "stride-1 identity path needs inp == out filters"

    xp = jnp.pad(x, ((0, 0), (padding, padding), (padding, padding), (0, 0)))
    hp, wp = h + 2 * padding, w + 2 * padding

    if downsample:
        # 2x2 stride-phase split of the padded input: the strided im2col taps
        # become unstrided static slices inside the kernel.
        x_args = [jax.lax.slice(xp, (0, a, b, 0), (n, hp, wp, cin),
                                (1, stride, stride, 1))
                  for a in range(stride) for b in range(stride)]
        for kh in range(k):
            for kw in range(k):
                ph = x_args[(kh % stride) * stride + (kw % stride)]
                assert ph.shape[1] >= kh // stride + ho
                assert ph.shape[2] >= kw // stride + wo
    else:
        x_args = [xp]

    args = x_args + [
        p["w1"].reshape(k * k * cin, cout),      # im2col weight (9*Cin,  Cout)
        p["g1"], p["b1"],
        p["w2"].reshape(k * k * cout, cout),     # im2col weight (9*Cout, Cout)
        p["g2"], p["b2"]]
    if downsample:
        args += [p["wd"], p["bd"]]

    kernel_fn = functools.partial(
        fused_block_kernel, n=n, ho=ho, wo=wo, cin=cin, cout=cout,
        k=k, pad=padding, stride=stride)

    rows = n * ho * wo
    out_shape = jax.ShapeDtypeStruct((rows, cout), jnp.float32)
    out2d = pl.pallas_call(
        kernel_fn,
        out_shape=out_shape,
        grid=(1,),
        in_specs=[_full_spec(a.shape) for a in args],
        out_specs=_full_spec(out_shape.shape),
        scratch_shapes=[pltpu.VMEM(
            (n, ho + 2 * padding, wo + 2 * padding, cout), jnp.float32)],
        compiler_params=pltpu.CompilerParams(
            dimension_semantics=("arbitrary",),
            vmem_limit_bytes=64 * 1024 * 1024),
    )(*args)

    out = out2d.reshape(n, ho, wo, cout)
    return jnp.transpose(out, (0, 3, 1, 2))                      # NHWC -> NCHW


# -------------------------- pure-JAX reference ------------------------------
def ref_forward(x, tp, *, stride, padding=1):
    def conv(x_, w_, s_, p_):
        return jax.lax.conv_general_dilated(
            x_, w_, (s_, s_), [(p_, p_), (p_, p_)],
            dimension_numbers=("NCHW", "OIHW", "NCHW"))

    def bn(x_, g, b):
        mean = x_.mean(axis=(0, 2, 3), keepdims=True)
        var = jnp.square(x_ - mean).mean(axis=(0, 2, 3), keepdims=True)
        return ((x_ - mean) * jax.lax.rsqrt(var + EPS)
                * g.reshape(1, -1, 1, 1) + b.reshape(1, -1, 1, 1))

    o = jax.nn.relu(bn(conv(x, tp["w1"], stride, padding), tp["g1"], tp["b1"]))
    o = bn(conv(o, tp["w2"], 1, padding), tp["g2"], tp["b2"])
    if stride == 2:
        idn = conv(x, tp["wd"], stride, 0) + tp["bd"].reshape(1, -1, 1, 1)
    else:
        idn = x
    return jax.nn.relu(o + idn)


# ------------------------- deterministic parameters -------------------------
def make_params(key, cin, cout, k=3):
    ks = jax.random.split(key, 8)
    w1 = 0.1 * jax.random.normal(ks[0], (cout, cin, k, k), jnp.float32)    # OIHW
    w2 = 0.1 * jax.random.normal(ks[1], (cout, cout, k, k), jnp.float32)
    g1 = 1.0 + 0.1 * jax.random.normal(ks[2], (cout,), jnp.float32)
    b1 = 0.1 * jax.random.normal(ks[3], (cout,), jnp.float32)
    g2 = 1.0 + 0.1 * jax.random.normal(ks[4], (cout,), jnp.float32)
    b2 = 0.1 * jax.random.normal(ks[5], (cout,), jnp.float32)
    wd = 0.1 * jax.random.normal(ks[6], (cout, cin, 1, 1), jnp.float32)    # 1x1
    bd = 0.1 * jax.random.normal(ks[7], (cout,), jnp.float32)
    torch_p = dict(w1=w1, w2=w2, g1=g1, b1=b1, g2=g2, b2=b2, wd=wd, bd=bd)
    kern_p = dict(
        w1=jnp.transpose(w1, (2, 3, 1, 0)),          # -> HWIO
        w2=jnp.transpose(w2, (2, 3, 1, 0)),
        g1=g1.reshape(1, cout), b1=b1.reshape(1, cout),
        g2=g2.reshape(1, cout), b2=b2.reshape(1, cout),
        wd=jnp.transpose(wd.reshape(cout, cin)),     # -> (Cin, Cout)
        bd=bd.reshape(1, cout),
    )
    return torch_p, kern_p


if __name__ == "__main__":
    key = jax.random.PRNGKey(0)
    k_x1, k_x2, k_p1, k_p2 = jax.random.split(key, 4)

    # Case A: stride=2 downsample path (inp_filters=4 -> out_filters=8)
    x1 = jax.random.normal(k_x1, (2, 4, 16, 16), jnp.float32)
    tp1, kp1 = make_params(k_p1, 4, 8)
    out1 = jax.block_until_ready(building_block_forward(x1, kp1, stride=2))
    ref1 = ref_forward(x1, tp1, stride=2)

    # Case B: stride=1 identity path (inp_filters = out_filters = 8)
    x2 = jax.random.normal(k_x2, (2, 8, 16, 16), jnp.float32)
    tp2, kp2 = make_params(k_p2, 8, 8)
    out2 = jax.block_until_ready(building_block_forward(x2, kp2, stride=1))
    ref2 = ref_forward(x2, tp2, stride=1)

    assert out1.shape == (2, 8, 8, 8), out1.shape
    assert out2.shape == (2, 8, 16, 16), out2.shape
    np.testing.assert_allclose(np.asarray(out1), np.asarray(ref1), rtol=2e-2, atol=2e-2)
    np.testing.assert_allclose(np.asarray(out2), np.asarray(ref2), rtol=2e-2, atol=2e-2)
    print("KERNEL_OK")
</pallas_src>

<mosaic_0001>
module attributes {stable_mosaic.version = 11 : i64} {
  func.func @fused_block_kernel(%arg0: i32, %arg1: memref<2x9x9x4xf32, #tpu.memory_space<vmem>>, %arg2: memref<2x9x9x4xf32, #tpu.memory_space<vmem>>, %arg3: memref<2x9x9x4xf32, #tpu.memory_space<vmem>>, %arg4: memref<2x9x9x4xf32, #tpu.memory_space<vmem>>, %arg5: memref<36x8xf32, #tpu.memory_space<vmem>>, %arg6: memref<1x8xf32, #tpu.memory_space<vmem>>, %arg7: memref<1x8xf32, #tpu.memory_space<vmem>>, %arg8: memref<72x8xf32, #tpu.memory_space<vmem>>, %arg9: memref<1x8xf32, #tpu.memory_space<vmem>>, %arg10: memref<1x8xf32, #tpu.memory_space<vmem>>, %arg11: memref<4x8xf32, #tpu.memory_space<vmem>>, %arg12: memref<1x8xf32, #tpu.memory_space<vmem>>, %arg13: memref<128x8xf32, #tpu.memory_space<vmem>>, %arg14: memref<2x10x10x8xf32, #tpu.memory_space<vmem>>) attributes {dimension_semantics = [#tpu.dimension_semantics<arbitrary>], iteration_bounds = array<i64: 1>, scalar_prefetch = 0 : i64, scratch_operands = 1 : i64, tpu.core_type = #tpu.core_type<tc>, window_params = [{pipeline_mode = #tpu.pipeline_mode<synchronous>, transform_indices = @transform_0, window_bounds = array<i64: 2, 9, 9, 4>}, {pipeline_mode = #tpu.pipeline_mode<synchronous>, transform_indices = @transform_1, window_bounds = array<i64: 2, 9, 9, 4>}, {pipeline_mode = #tpu.pipeline_mode<synchronous>, transform_indices = @transform_2, window_bounds = array<i64: 2, 9, 9, 4>}, {pipeline_mode = #tpu.pipeline_mode<synchronous>, transform_indices = @transform_3, window_bounds = array<i64: 2, 9, 9, 4>}, {pipeline_mode = #tpu.pipeline_mode<synchronous>, transform_indices = @transform_4, window_bounds = array<i64: 36, 8>}, {pipeline_mode = #tpu.pipeline_mode<synchronous>, transform_indices = @transform_5, window_bounds = array<i64: 1, 8>}, {pipeline_mode = #tpu.pipeline_mode<synchronous>, transform_indices = @transform_6, window_bounds = array<i64: 1, 8>}, {pipeline_mode = #tpu.pipeline_mode<synchronous>, transform_indices = @transform_7, window_bounds = array<i64: 72, 8>}, {pipeline_mode = #tpu.pipeline_mode<synchronous>, transform_indices = @transform_8, window_bounds = array<i64: 1, 8>}, {pipeline_mode = #tpu.pipeline_mode<synchronous>, transform_indices = @transform_9, window_bounds = array<i64: 1, 8>}, {pipeline_mode = #tpu.pipeline_mode<synchronous>, transform_indices = @transform_10, window_bounds = array<i64: 4, 8>}, {pipeline_mode = #tpu.pipeline_mode<synchronous>, transform_indices = @transform_11, window_bounds = array<i64: 1, 8>}, {pipeline_mode = #tpu.pipeline_mode<synchronous>, transform_indices = @transform_12, window_bounds = array<i64: 128, 8>}]} {
    %c0 = arith.constant 0 : index
    %c0_0 = arith.constant 0 : index
    %c0_1 = arith.constant 0 : index
    %c0_2 = arith.constant 0 : index
    %0 = vector.load %arg1[%c0, %c0_0, %c0_1, %c0_2] : memref<2x9x9x4xf32, #tpu.memory_space<vmem>>, vector<2x9x9x4xf32>
    %c0_3 = arith.constant 0 : index
    %c0_4 = arith.constant 0 : index
    %c0_5 = arith.constant 0 : index
    %c0_6 = arith.constant 0 : index
    %1 = vector.load %arg2[%c0_3, %c0_4, %c0_5, %c0_6] : memref<2x9x9x4xf32, #tpu.memory_space<vmem>>, vector<2x9x9x4xf32>
    %c0_7 = arith.constant 0 : index
    %c0_8 = arith.constant 0 : index
    %c0_9 = arith.constant 0 : index
    %c0_10 = arith.constant 0 : index
    %2 = vector.load %arg3[%c0_7, %c0_8, %c0_9, %c0_10] : memref<2x9x9x4xf32, #tpu.memory_space<vmem>>, vector<2x9x9x4xf32>
    %c0_11 = arith.constant 0 : index
    %c0_12 = arith.constant 0 : index
    %c0_13 = arith.constant 0 : index
    %c0_14 = arith.constant 0 : index
    %3 = vector.load %arg4[%c0_11, %c0_12, %c0_13, %c0_14] : memref<2x9x9x4xf32, #tpu.memory_space<vmem>>, vector<2x9x9x4xf32>
    %4 = vector.extract_strided_slice %0 {offsets = [0, 0, 0, 0], sizes = [2, 8, 8, 4], strides = [1, 1, 1, 1]} : vector<2x9x9x4xf32> to vector<2x8x8x4xf32>
    %5 = vector.extract_strided_slice %1 {offsets = [0, 0, 0, 0], sizes = [2, 8, 8, 4], strides = [1, 1, 1, 1]} : vector<2x9x9x4xf32> to vector<2x8x8x4xf32>
    %6 = vector.extract_strided_slice %0 {offsets = [0, 0, 1, 0], sizes = [2, 8, 8, 4], strides = [1, 1, 1, 1]} : vector<2x9x9x4xf32> to vector<2x8x8x4xf32>
    %7 = vector.extract_strided_slice %2 {offsets = [0, 0, 0, 0], sizes = [2, 8, 8, 4], strides = [1, 1, 1, 1]} : vector<2x9x9x4xf32> to vector<2x8x8x4xf32>
    %8 = vector.extract_strided_slice %3 {offsets = [0, 0, 0, 0], sizes = [2, 8, 8, 4], strides = [1, 1, 1, 1]} : vector<2x9x9x4xf32> to vector<2x8x8x4xf32>
    %9 = vector.extract_strided_slice %2 {offsets = [0, 0, 1, 0], sizes = [2, 8, 8, 4], strides = [1, 1, 1, 1]} : vector<2x9x9x4xf32> to vector<2x8x8x4xf32>
    %10 = vector.extract_strided_slice %0 {offsets = [0, 1, 0, 0], sizes = [2, 8, 8, 4], strides = [1, 1, 1, 1]} : vector<2x9x9x4xf32> to vector<2x8x8x4xf32>
    %11 = vector.extract_strided_slice %1 {offsets = [0, 1, 0, 0], sizes = [2, 8, 8, 4], strides = [1, 1, 1, 1]} : vector<2x9x9x4xf32> to vector<2x8x8x4xf32>
    %12 = vector.extract_strided_slice %0 {offsets = [0, 1, 1, 0], sizes = [2, 8, 8, 4], strides = [1, 1, 1, 1]} : vector<2x9x9x4xf32> to vector<2x8x8x4xf32>
    %13 = tpu.concatenate %4, %5, %6, %7, %8, %9, %10, %11, %12 in 3 : vector<2x8x8x4xf32>, vector<2x8x8x4xf32>, vector<2x8x8x4xf32>, vector<2x8x8x4xf32>, vector<2x8x8x4xf32>, vector<2x8x8x4xf32>, vector<2x8x8x4xf32>, vector<2x8x8x4xf32>, vector<2x8x8x4xf32> -> vector<2x8x8x36xf32>
    %14 = vector.shape_cast %13 : vector<2x8x8x36xf32> to vector<128x36xf32>
    %c0_15 = arith.constant 0 : index
    %c0_16 = arith.constant 0 : index
    %15 = vector.load %arg5[%c0_15, %c0_16] : memref<36x8xf32, #tpu.memory_space<vmem>>, vector<36x8xf32>
    %cst = arith.constant dense<0.000000e+00> : vector<128x8xf32>
    %16 = tpu.matmul %14, %15, %cst {dimension_numbers = #tpu.dot_dimension_numbers<[1], [0], [0], [1], [0, 0, 1, 1], [], []>} : vector<128x36xf32>, vector<36x8xf32>, vector<128x8xf32> -> vector<128x8xf32>
    %c0_17 = arith.constant 0 : index
    %c0_18 = arith.constant 0 : index
    %17 = vector.load %arg6[%c0_17, %c0_18] : memref<1x8xf32, #tpu.memory_space<vmem>>, vector<1x8xf32>
    %c0_19 = arith.constant 0 : index
    %c0_20 = arith.constant 0 : index
    %18 = vector.load %arg7[%c0_19, %c0_20] : memref<1x8xf32, #tpu.memory_space<vmem>>, vector<1x8xf32>
    %cst_21 = arith.constant dense<0.000000e+00> : vector<8xf32>
    %19 = vector.multi_reduction <add>, %16, %cst_21 [0] : vector<128x8xf32> to vector<8xf32>
    %20 = vector.shape_cast %19 : vector<8xf32> to vector<1x8xf32>
    %cst_22 = arith.constant 7.812500e-03 : f32
    %21 = vector.broadcast %cst_22 : f32 to vector<1x8xf32>
    %22 = arith.mulf %20, %21 : vector<1x8xf32>
    %23 = arith.mulf %16, %16 : vector<128x8xf32>
    %cst_23 = arith.constant dense<0.000000e+00> : vector<8xf32>
    %24 = vector.multi_reduction <add>, %23, %cst_23 [0] : vector<128x8xf32> to vector<8xf32>
    %25 = vector.shape_cast %24 : vector<8xf32> to vector<1x8xf32>
    %cst_24 = arith.constant 7.812500e-03 : f32
    %26 = vector.broadcast %cst_24 : f32 to vector<1x8xf32>
    %27 = arith.mulf %25, %26 : vector<1x8xf32>
    %28 = arith.mulf %22, %22 : vector<1x8xf32>
    %29 = arith.subf %27, %28 : vector<1x8xf32>
    %cst_25 = arith.constant 9.99999974E-6 : f32
    %30 = vector.broadcast %cst_25 : f32 to vector<1x8xf32>
    %31 = arith.addf %29, %30 : vector<1x8xf32>
    %32 = math.rsqrt %31 : vector<1x8xf32>
    %33 = arith.mulf %17, %32 : vector<1x8xf32>
    %34 = arith.mulf %22, %33 : vector<1x8xf32>
    %35 = arith.subf %18, %34 : vector<1x8xf32>
    %36 = vector.broadcast %33 : vector<1x8xf32> to vector<128x8xf32>
    %37 = arith.mulf %16, %36 : vector<128x8xf32>
    %38 = vector.broadcast %35 : vector<1x8xf32> to vector<128x8xf32>
    %39 = arith.addf %37, %38 : vector<128x8xf32>
    %cst_26 = arith.constant 0.000000e+00 : f32
    %40 = vector.broadcast %cst_26 : f32 to vector<128x8xf32>
    %41 = arith.maximumf %39, %40 : vector<128x8xf32>
    %cst_27 = arith.constant 0.000000e+00 : f32
    %42 = vector.broadcast %cst_27 : f32 to vector<2x10x10x8xf32>
    %c0_28 = arith.constant 0 : index
    %c0_29 = arith.constant 0 : index
    %c0_30 = arith.constant 0 : index
    %c0_31 = arith.constant 0 : index
    %43 = vector.load %arg14[%c0_28, %c0_29, %c0_30, %c0_31] : memref<2x10x10x8xf32, #tpu.memory_space<vmem>>, vector<2x10x10x8xf32>
    tpu.vector_store %arg14[%c0_28, %c0_29, %c0_30, %c0_31], %42 {strides = array<i32>} : memref<2x10x10x8xf32, #tpu.memory_space<vmem>>, vector<2x10x10x8xf32>,
    %44 = vector.shape_cast %41 : vector<128x8xf32> to vector<2x8x8x8xf32>
    %c0_32 = arith.constant 0 : index
    %c1 = arith.constant 1 : index
    %c1_33 = arith.constant 1 : index
    %c0_34 = arith.constant 0 : index
    %45 = vector.load %arg14[%c0_32, %c1, %c1_33, %c0_34] : memref<2x10x10x8xf32, #tpu.memory_space<vmem>>, vector<2x8x8x8xf32>
    tpu.vector_store %arg14[%c0_32, %c1, %c1_33, %c0_34], %44 {strides = array<i32>} : memref<2x10x10x8xf32, #tpu.memory_space<vmem>>, vector<2x8x8x8xf32>,
    %c0_35 = arith.constant 0 : index
    %c0_36 = arith.constant 0 : index
    %c0_37 = arith.constant 0 : index
    %c0_38 = arith.constant 0 : index
    %46 = vector.load %arg14[%c0_35, %c0_36, %c0_37, %c0_38] : memref<2x10x10x8xf32, #tpu.memory_space<vmem>>, vector<2x10x10x8xf32>
    %47 = vector.extract_strided_slice %46 {offsets = [0, 0, 0, 0], sizes = [2, 8, 8, 8], strides = [1, 1, 1, 1]} : vector<2x10x10x8xf32> to vector<2x8x8x8xf32>
    %48 = vector.extract_strided_slice %46 {offsets = [0, 0, 1, 0], sizes = [2, 8, 8, 8], strides = [1, 1, 1, 1]} : vector<2x10x10x8xf32> to vector<2x8x8x8xf32>
    %49 = vector.extract_strided_slice %46 {offsets = [0, 0, 2, 0], sizes = [2, 8, 8, 8], strides = [1, 1, 1, 1]} : vector<2x10x10x8xf32> to vector<2x8x8x8xf32>
    %50 = vector.extract_strided_slice %46 {offsets = [0, 1, 0, 0], sizes = [2, 8, 8, 8], strides = [1, 1, 1, 1]} : vector<2x10x10x8xf32> to vector<2x8x8x8xf32>
    %51 = vector.extract_strided_slice %46 {offsets = [0, 1, 1, 0], sizes = [2, 8, 8, 8], strides = [1, 1, 1, 1]} : vector<2x10x10x8xf32> to vector<2x8x8x8xf32>
    %52 = vector.extract_strided_slice %46 {offsets = [0, 1, 2, 0], sizes = [2, 8, 8, 8], strides = [1, 1, 1, 1]} : vector<2x10x10x8xf32> to vector<2x8x8x8xf32>
    %53 = vector.extract_strided_slice %46 {offsets = [0, 2, 0, 0], sizes = [2, 8, 8, 8], strides = [1, 1, 1, 1]} : vector<2x10x10x8xf32> to vector<2x8x8x8xf32>
    %54 = vector.extract_strided_slice %46 {offsets = [0, 2, 1, 0], sizes = [2, 8, 8, 8], strides = [1, 1, 1, 1]} : vector<2x10x10x8xf32> to vector<2x8x8x8xf32>
    %55 = vector.extract_strided_slice %46 {offsets = [0, 2, 2, 0], sizes = [2, 8, 8, 8], strides = [1, 1, 1, 1]} : vector<2x10x10x8xf32> to vector<2x8x8x8xf32>
    %56 = tpu.concatenate %47, %48, %49, %50, %51, %52, %53, %54, %55 in 3 : vector<2x8x8x8xf32>, vector<2x8x8x8xf32>, vector<2x8x8x8xf32>, vector<2x8x8x8xf32>, vector<2x8x8x8xf32>, vector<2x8x8x8xf32>, vector<2x8x8x8xf32>, vector<2x8x8x8xf32>, vector<2x8x8x8xf32> -> vector<2x8x8x72xf32>
    %57 = vector.shape_cast %56 : vector<2x8x8x72xf32> to vector<128x72xf32>
    %c0_39 = arith.constant 0 : index
    %c0_40 = arith.constant 0 : index
    %58 = vector.load %arg8[%c0_39, %c0_40] : memref<72x8xf32, #tpu.memory_space<vmem>>, vector<72x8xf32>
    %cst_41 = arith.constant dense<0.000000e+00> : vector<128x8xf32>
    %59 = tpu.matmul %57, %58, %cst_41 {dimension_numbers = #tpu.dot_dimension_numbers<[1], [0], [0], [1], [0, 0, 1, 1], [], []>} : vector<128x72xf32>, vector<72x8xf32>, vector<128x8xf32> -> vector<128x8xf32>
    %c0_42 = arith.constant 0 : index
    %c0_43 = arith.constant 0 : index
    %60 = vector.load %arg9[%c0_42, %c0_43] : memref<1x8xf32, #tpu.memory_space<vmem>>, vector<1x8xf32>
    %c0_44 = arith.constant 0 : index
    %c0_45 = arith.constant 0 : index
    %61 = vector.load %arg10[%c0_44, %c0_45] : memref<1x8xf32, #tpu.memory_space<vmem>>, vector<1x8xf32>
    %cst_46 = arith.constant dense<0.000000e+00> : vector<8xf32>
    %62 = vector.multi_reduction <add>, %59, %cst_46 [0] : vector<128x8xf32> to vector<8xf32>
    %63 = vector.shape_cast %62 : vector<8xf32> to vector<1x8xf32>
    %cst_47 = arith.constant 7.812500e-03 : f32
    %64 = vector.broadcast %cst_47 : f32 to vector<1x8xf32>
    %65 = arith.mulf %63, %64 : vector<1x8xf32>
    %66 = arith.mulf %59, %59 : vector<128x8xf32>
    %cst_48 = arith.constant dense<0.000000e+00> : vector<8xf32>
    %67 = vector.multi_reduction <add>, %66, %cst_48 [0] : vector<128x8xf32> to vector<8xf32>
    %68 = vector.shape_cast %67 : vector<8xf32> to vector<1x8xf32>
    %cst_49 = arith.constant 7.812500e-03 : f32
    %69 = vector.broadcast %cst_49 : f32 to vector<1x8xf32>
    %70 = arith.mulf %68, %69 : vector<1x8xf32>
    %71 = arith.mulf %65, %65 : vector<1x8xf32>
    %72 = arith.subf %70, %71 : vector<1x8xf32>
    %cst_50 = arith.constant 9.99999974E-6 : f32
    %73 = vector.broadcast %cst_50 : f32 to vector<1x8xf32>
    %74 = arith.addf %72, %73 : vector<1x8xf32>
    %75 = math.rsqrt %74 : vector<1x8xf32>
    %76 = arith.mulf %60, %75 : vector<1x8xf32>
    %77 = arith.mulf %65, %76 : vector<1x8xf32>
    %78 = arith.subf %61, %77 : vector<1x8xf32>
    %79 = vector.broadcast %76 : vector<1x8xf32> to vector<128x8xf32>
    %80 = arith.mulf %59, %79 : vector<128x8xf32>
    %81 = vector.broadcast %78 : vector<1x8xf32> to vector<128x8xf32>
    %82 = arith.addf %80, %81 : vector<128x8xf32>
    %83 = vector.extract_strided_slice %3 {offsets = [0, 0, 0, 0], sizes = [2, 8, 8, 4], strides = [1, 1, 1, 1]} : vector<2x9x9x4xf32> to vector<2x8x8x4xf32>
    %84 = vector.shape_cast %83 : vector<2x8x8x4xf32> to vector<128x4xf32>
    %c0_51 = arith.constant 0 : index
    %c0_52 = arith.constant 0 : index
    %85 = vector.load %arg11[%c0_51, %c0_52] : memref<4x8xf32, #tpu.memory_space<vmem>>, vector<4x8xf32>
    %cst_53 = arith.constant dense<0.000000e+00> : vector<128x8xf32>
    %86 = tpu.matmul %84, %85, %cst_53 {dimension_numbers = #tpu.dot_dimension_numbers<[1], [0], [0], [1], [0, 0, 1, 1], [], []>} : vector<128x4xf32>, vector<4x8xf32>, vector<128x8xf32> -> vector<128x8xf32>
    %c0_54 = arith.constant 0 : index
    %c0_55 = arith.constant 0 : index
    %87 = vector.load %arg12[%c0_54, %c0_55] : memref<1x8xf32, #tpu.memory_space<vmem>>, vector<1x8xf32>
    %88 = vector.broadcast %87 : vector<1x8xf32> to vector<128x8xf32>
    %89 = arith.addf %86, %88 : vector<128x8xf32>
    %90 = arith.addf %82, %89 : vector<128x8xf32>
    %cst_56 = arith.constant 0.000000e+00 : f32
    %91 = vector.broadcast %cst_56 : f32 to vector<128x8xf32>
    %92 = arith.maximumf %90, %91 : vector<128x8xf32>
    %c0_57 = arith.constant 0 : index
    %c0_58 = arith.constant 0 : index
    %93 = vector.load %arg13[%c0_57, %c0_58] : memref<128x8xf32, #tpu.memory_space<vmem>>, vector<128x8xf32>
    tpu.vector_store %arg13[%c0_57, %c0_58], %92 {strides = array<i32>} : memref<128x8xf32, #tpu.memory_space<vmem>>, vector<128x8xf32>,
    return
  }
  func.func @transform_0(%arg0: i32) -> (i32, i32, i32, i32) {
    %c0_i32 = arith.constant 0 : i32
    %c0_i32_0 = arith.constant 0 : i32
    %c0_i32_1 = arith.constant 0 : i32
    %c0_i32_2 = arith.constant 0 : i32
    %c0_i32_3 = arith.constant 0 : i32
    return %c0_i32, %c0_i32_0, %c0_i32_1, %c0_i32_2 : i32, i32, i32, i32
  }
  func.func @transform_1(%arg0: i32) -> (i32, i32, i32, i32) {
    %c0_i32 = arith.constant 0 : i32
    %c0_i32_0 = arith.constant 0 : i32
    %c0_i32_1 = arith.constant 0 : i32
    %c0_i32_2 = arith.constant 0 : i32
    %c0_i32_3 = arith.constant 0 : i32
    return %c0_i32, %c0_i32_0, %c0_i32_1, %c0_i32_2 : i32, i32, i32, i32
  }
  func.func @transform_2(%arg0: i32) -> (i32, i32, i32, i32) {
    %c0_i32 = arith.constant 0 : i32
    %c0_i32_0 = arith.constant 0 : i32
    %c0_i32_1 = arith.constant 0 : i32
    %c0_i32_2 = arith.constant 0 : i32
    %c0_i32_3 = arith.constant 0 : i32
    return %c0_i32, %c0_i32_0, %c0_i32_1, %c0_i32_2 : i32, i32, i32, i32
  }
  func.func @transform_3(%arg0: i32) -> (i32, i32, i32, i32) {
    %c0_i32 = arith.constant 0 : i32
    %c0_i32_0 = arith.constant 0 : i32
    %c0_i32_1 = arith.constant 0 : i32
    %c0_i32_2 = arith.constant 0 : i32
    %c0_i32_3 = arith.constant 0 : i32
    return %c0_i32, %c0_i32_0, %c0_i32_1, %c0_i32_2 : i32, i32, i32, i32
  }
  func.func @transform_4(%arg0: i32) -> (i32, i32) {
    %c0_i32 = arith.constant 0 : i32
    %c0_i32_0 = arith.constant 0 : i32
    %c0_i32_1 = arith.constant 0 : i32
    return %c0_i32, %c0_i32_0 : i32, i32
  }
  func.func @transform_5(%arg0: i32) -> (i32, i32) {
    %c0_i32 = arith.constant 0 : i32
    %c0_i32_0 = arith.constant 0 : i32
    %c0_i32_1 = arith.constant 0 : i32
    return %c0_i32, %c0_i32_0 : i32, i32
  }
  func.func @transform_6(%arg0: i32) -> (i32, i32) {
    %c0_i32 = arith.constant 0 : i32
    %c0_i32_0 = arith.constant 0 : i32
    %c0_i32_1 = arith.constant 0 : i32
    return %c0_i32, %c0_i32_0 : i32, i32
  }
  func.func @transform_7(%arg0: i32) -> (i32, i32) {
    %c0_i32 = arith.constant 0 : i32
    %c0_i32_0 = arith.constant 0 : i32
    %c0_i32_1 = arith.constant 0 : i32
    return %c0_i32, %c0_i32_0 : i32, i32
  }
  func.func @transform_8(%arg0: i32) -> (i32, i32) {
    %c0_i32 = arith.constant 0 : i32
    %c0_i32_0 = arith.constant 0 : i32
    %c0_i32_1 = arith.constant 0 : i32
    return %c0_i32, %c0_i32_0 : i32, i32
  }
  func.func @transform_9(%arg0: i32) -> (i32, i32) {
    %c0_i32 = arith.constant 0 : i32
    %c0_i32_0 = arith.constant 0 : i32
    %c0_i32_1 = arith.constant 0 : i32
    return %c0_i32, %c0_i32_0 : i32, i32
  }
  func.func @transform_10(%arg0: i32) -> (i32, i32) {
    %c0_i32 = arith.constant 0 : i32
    %c0_i32_0 = arith.constant 0 : i32
    %c0_i32_1 = arith.constant 0 : i32
    return %c0_i32, %c0_i32_0 : i32, i32
  }
  func.func @transform_11(%arg0: i32) -> (i32, i32) {
    %c0_i32 = arith.constant 0 : i32
    %c0_i32_0 = arith.constant 0 : i32
    %c0_i32_1 = arith.constant 0 : i32
    return %c0_i32, %c0_i32_0 : i32, i32
  }
  func.func @transform_12(%arg0: i32) -> (i32, i32) {
    %c0_i32 = arith.constant 0 : i32
    %c0_i32_0 = arith.constant 0 : i32
    %c0_i32_1 = arith.constant 0 : i32
    return %c0_i32, %c0_i32_0 : i32, i32
  }
}

</mosaic_0001>

<llo_original>
// kernel: tpu_custom_call.1
$region0: #{tpu_custom_call.1}
  #allocation0 [shape = 'u32[]', space=smem, size = 0x4, offset = 0x4, fixed_abs, tag = 'smem constant byte address 0x4 - core index']
  #allocation1 [shape = 'u32[144,128]{1,0:T(1,128)}', space=vmem, size = 0x12000, scoped, tag = 'internal scratch']
  #allocation2 [shape = 'f32[2,10,10,8]{3,2,1,0:T(8,128)}', space=vmem, size = 0x28000, scoped, tag = 'scratch operand']
  %s0 = inlined_call_operand.hbm [shape: f32[2,9,9,4], index: 0, kind: input, shape index: {}]
  %s1 = inlined_call_operand.hbm [shape: f32[2,9,9,4], index: 1, kind: input, shape index: {}]
  %s2 = inlined_call_operand.hbm [shape: f32[2,9,9,4], index: 2, kind: input, shape index: {}]
  %s3 = inlined_call_operand.hbm [shape: f32[2,9,9,4], index: 3, kind: input, shape index: {}]
  %s4 = inlined_call_operand.hbm [shape: f32[36,8], index: 4, kind: input, shape index: {}]
  %s5 = inlined_call_operand.hbm [shape: f32[1,8], index: 5, kind: input, shape index: {}]
  %s6 = inlined_call_operand.hbm [shape: f32[1,8], index: 6, kind: input, shape index: {}]
  %s7 = inlined_call_operand.hbm [shape: f32[72,8], index: 7, kind: input, shape index: {}]
  %s8 = inlined_call_operand.hbm [shape: f32[1,8], index: 8, kind: input, shape index: {}]
  %s9 = inlined_call_operand.hbm [shape: f32[1,8], index: 9, kind: input, shape index: {}]
  %s10 = inlined_call_operand.hbm [shape: f32[4,8], index: 10, kind: input, shape index: {}]
  %s11 = inlined_call_operand.hbm [shape: f32[1,8], index: 11, kind: input, shape index: {}]
  %s12 = inlined_call_operand.hbm [shape: f32[128,8], index: 12, kind: output, shape index: {}]
  %s13 = sld [smem:[#allocation0]]
  $region106: #{tpu_custom_call.1} parent=0
    _
  %s15 = ssub.s32 1, %s13
  %s16 = scalar_select 0, %s15, %s13
  $region1: #{tpu_custom_call.1} parent=0
    #allocation3 [shape = 'u8[147456]{0}', space=vmem, size = 0x24000, scoped, tag = 'input window, operand 0, single buffered']
    #allocation4 [shape = 's32[1]{0}', space=sflag, size = 0x4, scoped, tag = 'scoped memory for tpu_custom_call.1']
    #allocation5 [shape = 's32[1]{0}', space=sflag, size = 0x4, scoped, tag = 'scoped memory for tpu_custom_call.1']
    #allocation6 [shape = 'u8[147456]{0}', space=vmem, size = 0x24000, scoped, tag = 'input window, operand 1, single buffered']
    #allocation7 [shape = 's32[1]{0}', space=sflag, size = 0x4, scoped, tag = 'scoped memory for tpu_custom_call.1']
    #allocation8 [shape = 'u8[147456]{0}', space=vmem, size = 0x24000, scoped, tag = 'input window, operand 2, single buffered']
    #allocation9 [shape = 'u8[147456]{0}', space=vmem, size = 0x24000, scoped, tag = 'input window, operand 3, single buffered']
    #allocation10 [shape = 's32[1]{0}', space=sflag, size = 0x4, scoped, tag = 'scoped memory for tpu_custom_call.1']
    #allocation11 [shape = 'u8[20480]{0}', space=vmem, size = 0x5000, scoped, tag = 'input window, operand 4, single buffered']
    #allocation12 [shape = 'u8[512]{0}', space=vmem, size = 0x400, scoped, tag = 'input window, operand 5, single buffered']
    #allocation13 [shape = 's32[1]{0}', space=sflag, size = 0x4, scoped, tag = 'scoped memory for tpu_custom_call.1']
    #allocation14 [shape = 'u8[512]{0}', space=vmem, size = 0x400, scoped, tag = 'input window, operand 6, single buffered']
    #allocation15 [shape = 'u8[36864]{0}', space=vmem, size = 0x9000, scoped, tag = 'input window, operand 7, single buffered']
    #allocation16 [shape = 's32[1]{0}', space=sflag, size = 0x4, scoped, tag = 'scoped memory for tpu_custom_call.1']
    #allocation17 [shape = 'u8[512]{0}', space=vmem, size = 0x400, scoped, tag = 'input window, operand 8, single buffered']
    #allocation18 [shape = 'u8[512]{0}', space=vmem, size = 0x400, scoped, tag = 'input window, operand 9, single buffered']
    #allocation19 [shape = 's32[1]{0}', space=sflag, size = 0x4, scoped, tag = 'scoped memory for tpu_custom_call.1']
    #allocation20 [shape = 'u8[2048]{0}', space=vmem, size = 0x800, scoped, tag = 'input window, operand 10, single buffered']
    #allocation21 [shape = 'u8[512]{0}', space=vmem, size = 0x400, scoped, tag = 'input window, operand 11, single buffered']
    #allocation22 [shape = 's32[1]{0}', space=sflag, size = 0x4, scoped, tag = 'scoped memory for tpu_custom_call.1']
    #allocation23 [shape = 'u8[65536]{0}', space=vmem, size = 0x10000, scoped, tag = 'output window, operand 0, single buffered']
    %17 = vsyncpa [#allocation4], 0
    %18 = vsyncpa [#allocation7], 0
    %19 = vsyncpa [#allocation10], 0
    %20 = vsyncpa [#allocation13], 0
    %21 = vsyncpa [#allocation16], 0
    %22 = vsyncpa [#allocation19], 0
    %23 = vsyncpa [#allocation22], 0
    %24 = vsyncpa [#allocation5], 0
    // Predicated region
    $region2: #{tpu_custom_call.1} parent=1 // pred_check
      _
    $region3: #{tpu_custom_call.1} parent=1 // pred_check_branch
      %26 = sbr.rel (0) target = $region5
    $region4: #{tpu_custom_call.1} parent=1 // pred_region
      %s28 = ssub.s32 4608, 4608
      %29 = vsyncadd [#allocation4], %s28
      %s30 = sshll.u32 [#allocation3], 4
      %s31 = int_to_ptr.vmem [resolvable:$true] %s30
      %36 = dma.hbm_to_vmem [thread:$0]  %s0, 4608, %s31, [#allocation4], 128, 128, 8
    $region5: #{tpu_custom_call.1} parent=1 // pred_fallthru
      _
    // Predicated region
    $region6: #{tpu_custom_call.1} parent=1 // pred_check
      _
    $region7: #{tpu_custom_call.1} parent=1 // pred_check_branch
      %38 = sbr.rel (0) target = $region9
    $region8: #{tpu_custom_call.1} parent=1 // pred_region
      %s40 = ssub.s32 4608, 4608
      %41 = vsyncadd [#allocation7], %s40
      %s42 = sshll.u32 [#allocation6], 4
      %s43 = int_to_ptr.vmem [resolvable:$true] %s42
      %48 = dma.hbm_to_vmem [thread:$0]  %s1, 4608, %s43, [#allocation7], 128, 128, 8
    $region9: #{tpu_custom_call.1} parent=1 // pred_fallthru
      _
    // Predicated region
    $region10: #{tpu_custom_call.1} parent=1 // pred_check
      _
    $region11: #{tpu_custom_call.1} parent=1 // pred_check_branch
      %50 = sbr.rel (0) target = $region13
    $region12: #{tpu_custom_call.1} parent=1 // pred_region
      %s52 = ssub.s32 4608, 4608
      %53 = vsyncadd [#allocation7], %s52
      %s54 = sshll.u32 [#allocation8], 4
      %s55 = int_to_ptr.vmem [resolvable:$true] %s54
      %60 = dma.hbm_to_vmem [thread:$0]  %s2, 4608, %s55, [#allocation7], 128, 128, 8
    $region13: #{tpu_custom_call.1} parent=1 // pred_fallthru
      _
    // Predicated region
    $region14: #{tpu_custom_call.1} parent=1 // pred_check
      _
    $region15: #{tpu_custom_call.1} parent=1 // pred_check_branch
      %62 = sbr.rel (0) target = $region17
    $region16: #{tpu_custom_call.1} parent=1 // pred_region
      %s64 = ssub.s32 4608, 4608
      %65 = vsyncadd [#allocation10], %s64
      %s66 = sshll.u32 [#allocation9], 4
      %s67 = int_to_ptr.vmem [resolvable:$true] %s66
      %72 = dma.hbm_to_vmem [thread:$0]  %s3, 4608, %s67, [#allocation10], 128, 128, 8
    $region17: #{tpu_custom_call.1} parent=1 // pred_fallthru
      _
    // Predicated region
    $region18: #{tpu_custom_call.1} parent=1 // pred_check
      _
    $region19: #{tpu_custom_call.1} parent=1 // pred_check_branch
      %74 = sbr.rel (0) target = $region21
    $region20: #{tpu_custom_call.1} parent=1 // pred_region
      %s76 = ssub.s32 640, 640
      %77 = vsyncadd [#allocation10], %s76
      %s78 = sshll.u32 [#allocation11], 4
      %s79 = int_to_ptr.vmem [resolvable:$true] %s78
      %84 = dma.hbm_to_vmem [thread:$0]  %s4, 640, %s79, [#allocation10], 128, 128, 8
    $region21: #{tpu_custom_call.1} parent=1 // pred_fallthru
      _
    // Predicated region
    $region22: #{tpu_custom_call.1} parent=1 // pred_check
      _
    $region23: #{tpu_custom_call.1} parent=1 // pred_check_branch
      %86 = sbr.rel (0) target = $region25
    $region24: #{tpu_custom_call.1} parent=1 // pred_region
      %s88 = ssub.s32 16, 16
      %89 = vsyncadd [#allocation13], %s88
      %s91 = sshll.u32 [#allocation12], 4
      %s92 = int_to_ptr.vmem [resolvable:$true] %s91
      %94 = dma.hbm_to_vmem [thread:$0]  %s5, 16, %s92, [#allocation13]
    $region25: #{tpu_custom_call.1} parent=1 // pred_fallthru
      _
    // Predicated region
    $region26: #{tpu_custom_call.1} parent=1 // pred_check
      _
    $region27: #{tpu_custom_call.1} parent=1 // pred_check_branch
      %96 = sbr.rel (0) target = $region29
    $region28: #{tpu_custom_call.1} parent=1 // pred_region
      %s98 = ssub.s32 16, 16
      %99 = vsyncadd [#allocation13], %s98
      %s101 = sshll.u32 [#allocation14], 4
      %s102 = int_to_ptr.vmem [resolvable:$true] %s101
      %104 = dma.hbm_to_vmem [thread:$0]  %s6, 16, %s102, [#allocation13]
    $region29: #{tpu_custom_call.1} parent=1 // pred_fallthru
      _
    // Predicated region
    $region30: #{tpu_custom_call.1} parent=1 // pred_check
      _
    $region31: #{tpu_custom_call.1} parent=1 // pred_check_branch
      %106 = sbr.rel (0) target = $region33
    $region32: #{tpu_custom_call.1} parent=1 // pred_region
      %s108 = ssub.s32 1152, 1152
      %109 = vsyncadd [#allocation16], %s108
      %s110 = sshll.u32 [#allocation15], 4
      %s111 = int_to_ptr.vmem [resolvable:$true] %s110
      %116 = dma.hbm_to_vmem [thread:$0]  %s7, 1152, %s111, [#allocation16], 128, 128, 8
    $region33: #{tpu_custom_call.1} parent=1 // pred_fallthru
      _
    // Predicated region
    $region34: #{tpu_custom_call.1} parent=1 // pred_check
      _
    $region35: #{tpu_custom_call.1} parent=1 // pred_check_branch
      %118 = sbr.rel (0) target = $region37
    $region36: #{tpu_custom_call.1} parent=1 // pred_region
      %s120 = ssub.s32 16, 16
      %121 = vsyncadd [#allocation16], %s120
      %s123 = sshll.u32 [#allocation17], 4
      %s124 = int_to_ptr.vmem [resolvable:$true] %s123
      %126 = dma.hbm_to_vmem [thread:$0]  %s8, 16, %s124, [#allocation16]
    $region37: #{tpu_custom_call.1} parent=1 // pred_fallthru
      _
    // Predicated region
    $region38: #{tpu_custom_call.1} parent=1 // pred_check
      _
    $region39: #{tpu_custom_call.1} parent=1 // pred_check_branch
      %128 = sbr.rel (0) target = $region41
    $region40: #{tpu_custom_call.1} parent=1 // pred_region
      %s130 = ssub.s32 16, 16
      %131 = vsyncadd [#allocation19], %s130
      %s133 = sshll.u32 [#allocation18], 4
      %s134 = int_to_ptr.vmem [resolvable:$true] %s133
      %136 = dma.hbm_to_vmem [thread:$0]  %s9, 16, %s134, [#allocation19]
    $region41: #{tpu_custom_call.1} parent=1 // pred_fallthru
      _
    // Predicated region
    $region42: #{tpu_custom_call.1} parent=1 // pred_check
      _
    $region43: #{tpu_custom_call.1} parent=1 // pred_check_branch
      %138 = sbr.rel (0) target = $region45
    $region44: #{tpu_custom_call.1} parent=1 // pred_region
      %s140 = ssub.s32 64, 64
      %141 = vsyncadd [#allocation19], %s140
      %s143 = sshll.u32 [#allocation20], 4
      %s144 = int_to_ptr.vmem [resolvable:$true] %s143
      %146 = dma.hbm_to_vmem [thread:$0]  %s10, 64, %s144, [#allocation19]
    $region45: #{tpu_custom_call.1} parent=1 // pred_fallthru
      _
    // Predicated region
    $region46: #{tpu_custom_call.1} parent=1 // pred_check
      _
    $region47: #{tpu_custom_call.1} parent=1 // pred_check_branch
      %148 = sbr.rel (0) target = $region49
    $region48: #{tpu_custom_call.1} parent=1 // pred_region
      %s150 = ssub.s32 16, 16
      %151 = vsyncadd [#allocation22], %s150
      %s153 = sshll.u32 [#allocation21], 4
      %s154 = int_to_ptr.vmem [resolvable:$true] %s153
      %156 = dma.hbm_to_vmem [thread:$0]  %s11, 16, %s154, [#allocation22]
    $region49: #{tpu_custom_call.1} parent=1 // pred_fallthru
      _
    // Predicated region
    $region50: #{tpu_custom_call.1} parent=1 // pred_check
      _
    $region51: #{tpu_custom_call.1} parent=1 // pred_check_branch
      %158 = sbr.rel (0) target = $region53
    $region52: #{tpu_custom_call.1} parent=1 // pred_region
      %159 = dma.done [#allocation4], 4608
    $region53: #{tpu_custom_call.1} parent=1 // pred_fallthru
      _
    // Predicated region
    $region54: #{tpu_custom_call.1} parent=1 // pred_check
      _
    $region55: #{tpu_custom_call.1} parent=1 // pred_check_branch
      %161 = sbr.rel (0) target = $region57
    $region56: #{tpu_custom_call.1} parent=1 // pred_region
      %162 = dma.done [#allocation7], 4608
    $region57: #{tpu_custom_call.1} parent=1 // pred_fallthru
      _
    // Predicated region
    $region58: #{tpu_custom_call.1} parent=1 // pred_check
      _
    $region59: #{tpu_custom_call.1} parent=1 // pred_check_branch
      %164 = sbr.rel (0) target = $region61
    $region60: #{tpu_custom_call.1} parent=1 // pred_region
      %165 = dma.done [#allocation7], 4608
    $region61: #{tpu_custom_call.1} parent=1 // pred_fallthru
      _
    // Predicated region
    $region62: #{tpu_custom_call.1} parent=1 // pred_check
      _
    $region63: #{tpu_custom_call.1} parent=1 // pred_check_branch
      %167 = sbr.rel (0) target = $region65
    $region64: #{tpu_custom_call.1} parent=1 // pred_region
      %168 = dma.done [#allocation10], 4608
    $region65: #{tpu_custom_call.1} parent=1 // pred_fallthru
      _
    // Predicated region
    $region66: #{tpu_custom_call.1} parent=1 // pred_check
      _
    $region67: #{tpu_custom_call.1} parent=1 // pred_check_branch
      %170 = sbr.rel (0) target = $region69
    $region68: #{tpu_custom_call.1} parent=1 // pred_region
      %171 = dma.done [#allocation10], 640
    $region69: #{tpu_custom_call.1} parent=1 // pred_fallthru
      _
    // Predicated region
    $region70: #{tpu_custom_call.1} parent=1 // pred_check
      _
    $region71: #{tpu_custom_call.1} parent=1 // pred_check_branch
      %173 = sbr.rel (0) target = $region73
    $region72: #{tpu_custom_call.1} parent=1 // pred_region
      %174 = dma.done [#allocation13], 16
    $region73: #{tpu_custom_call.1} parent=1 // pred_fallthru
      _
    // Predicated region
    $region74: #{tpu_custom_call.1} parent=1 // pred_check
      _
    $region75: #{tpu_custom_call.1} parent=1 // pred_check_branch
      %176 = sbr.rel (0) target = $region77
    $region76: #{tpu_custom_call.1} parent=1 // pred_region
      %177 = dma.done [#allocation13], 16
    $region77: #{tpu_custom_call.1} parent=1 // pred_fallthru
      _
    // Predicated region
    $region78: #{tpu_custom_call.1} parent=1 // pred_check
      _
    $region79: #{tpu_custom_call.1} parent=1 // pred_check_branch
      %179 = sbr.rel (0) target = $region81
    $region80: #{tpu_custom_call.1} parent=1 // pred_region
      %180 = dma.done [#allocation16], 1152
    $region81: #{tpu_custom_call.1} parent=1 // pred_fallthru
      _
    // Predicated region
    $region82: #{tpu_custom_call.1} parent=1 // pred_check
      _
    $region83: #{tpu_custom_call.1} parent=1 // pred_check_branch
      %182 = sbr.rel (0) target = $region85
    $region84: #{tpu_custom_call.1} parent=1 // pred_region
      %183 = dma.done [#allocation16], 16
    $region85: #{tpu_custom_call.1} parent=1 // pred_fallthru
      _
    // Predicated region
    $region86: #{tpu_custom_call.1} parent=1 // pred_check
      _
    $region87: #{tpu_custom_call.1} parent=1 // pred_check_branch
      %185 = sbr.rel (0) target = $region89
    $region88: #{tpu_custom_call.1} parent=1 // pred_region
      %186 = dma.done [#allocation19], 16
    $region89: #{tpu_custom_call.1} parent=1 // pred_fallthru
      _
    // Predicated region
    $region90: #{tpu_custom_call.1} parent=1 // pred_check
      _
    $region91: #{tpu_custom_call.1} parent=1 // pred_check_branch
      %188 = sbr.rel (0) target = $region93
    $region92: #{tpu_custom_call.1} parent=1 // pred_region
      %189 = dma.done [#allocation19], 64
    $region93: #{tpu_custom_call.1} parent=1 // pred_fallthru
      _
    // Predicated region
    $region94: #{tpu_custom_call.1} parent=1 // pred_check
      _
    $region95: #{tpu_custom_call.1} parent=1 // pred_check_branch
      %191 = sbr.rel (0) target = $region97
    $region96: #{tpu_custom_call.1} parent=1 // pred_region
      %192 = dma.done [#allocation22], 16
    $region97: #{tpu_custom_call.1} parent=1 // pred_fallthru
      _
    %v193 = vld [vmem:[#allocation3] sm:$0xff]
    %v194 = vld [vmem:[#allocation3 + $0x8] sm:$0x1]
    %v195 = vld [vmem:[#allocation3 + $0x10] sm:$0xff]
    %v196 = vld [vmem:[#allocation3 + $0x18] sm:$0x1]
    %v197 = vld [vmem:[#allocation3 + $0x20] sm:$0xff]
    %v198 = vld [vmem:[#allocation3 + $0x28] sm:$0x1]
    %v199 = vld [vmem:[#allocation3 + $0x30] sm:$0xff]
    %v200 = vld [vmem:[#allocation3 + $0x38] sm:$0x1]
    %v201 = vld [vmem:[#allocation3 + $0x40] sm:$0xff]
    %v202 = vld [vmem:[#allocation3 + $0x48] sm:$0x1]
    %v203 = vld [vmem:[#allocation3 + $0x50] sm:$0xff]
    %v204 = vld [vmem:[#allocation3 + $0x58] sm:$0x1]
    %v205 = vld [vmem:[#allocation3 + $0x60] sm:$0xff]
    %v206 = vld [vmem:[#allocation3 + $0x68] sm:$0x1]
    %v207 = vld [vmem:[#allocation3 + $0x70] sm:$0xff]
    %v208 = vld [vmem:[#allocation3 + $0x78] sm:$0x1]
    %v209 = vld [vmem:[#allocation3 + $0x80] sm:$0xff]
    %v210 = vld [vmem:[#allocation3 + $0x88] sm:$0x1]
    %v211 = vld [vmem:[#allocation3 + $0x90] sm:$0xff]
    %v212 = vld [vmem:[#allocation3 + $0x98] sm:$0x1]
    %v213 = vld [vmem:[#allocation3 + $0xa0] sm:$0xff]
    %v214 = vld [vmem:[#allocation3 + $0xa8] sm:$0x1]
    %v215 = vld [vmem:[#allocation3 + $0xb0] sm:$0xff]
    %v216 = vld [vmem:[#allocation3 + $0xb8] sm:$0x1]
    %v217 = vld [vmem:[#allocation3 + $0xc0] sm:$0xff]
    %v218 = vld [vmem:[#allocation3 + $0xc8] sm:$0x1]
    %v219 = vld [vmem:[#allocation3 + $0xd0] sm:$0xff]
    %v220 = vld [vmem:[#allocation3 + $0xd8] sm:$0x1]
    %v221 = vld [vmem:[#allocation3 + $0xe0] sm:$0xff]
    %v222 = vld [vmem:[#allocation3 + $0xe8] sm:$0x1]
    %v223 = vld [vmem:[#allocation3 + $0xf0] sm:$0xff]
    %v224 = vld [vmem:[#allocation3 + $0xf8] sm:$0x1]
    %v225 = vld [vmem:[#allocation3 + $0x100] sm:$0xff]
    %v226 = vld [vmem:[#allocation3 + $0x108] sm:$0x1]
    %v227 = vld [vmem:[#allocation3 + $0x110] sm:$0xff]
    %v228 = vld [vmem:[#allocation3 + $0x118] sm:$0x1]
    %v229 = vld [vmem:[#allocation6] sm:$0xff]
    %v230 = vld [vmem:[#allocation6 + $0x10] sm:$0xff]
    %v231 = vld [vmem:[#allocation6 + $0x20] sm:$0xff]
    %v232 = vld [vmem:[#allocation6 + $0x30] sm:$0xff]
    %v233 = vld [vmem:[#allocation6 + $0x40] sm:$0xff]
    %v234 = vld [vmem:[#allocation6 + $0x50] sm:$0xff]
    %v235 = vld [vmem:[#allocation6 + $0x60] sm:$0xff]
    %v236 = vld [vmem:[#allocation6 + $0x70] sm:$0xff]
    %v237 = vld [vmem:[#allocation6 + $0x80] sm:$0xff]
    %v238 = vld [vmem:[#allocation6 + $0x90] sm:$0xff]
    %v239 = vld [vmem:[#allocation6 + $0xa0] sm:$0xff]
    %v240 = vld [vmem:[#allocation6 + $0xb0] sm:$0xff]
    %v241 = vld [vmem:[#allocation6 + $0xc0] sm:$0xff]
    %v242 = vld [vmem:[#allocation6 + $0xd0] sm:$0xff]
    %v243 = vld [vmem:[#allocation6 + $0xe0] sm:$0xff]
    %v244 = vld [vmem:[#allocation6 + $0xf0] sm:$0xff]
    %v245 = vld [vmem:[#allocation6 + $0x100] sm:$0xff]
    %v246 = vld [vmem:[#allocation6 + $0x110] sm:$0xff]
    %v247 = vld [vmem:[#allocation8] sm:$0xff]
    %v248 = vld [vmem:[#allocation8 + $0x8] sm:$0x1]
    %v249 = vld [vmem:[#allocation8 + $0x10] sm:$0xff]
    %v250 = vld [vmem:[#allocation8 + $0x18] sm:$0x1]
    %v251 = vld [vmem:[#allocation8 + $0x20] sm:$0xff]
    %v252 = vld [vmem:[#allocation8 + $0x28] sm:$0x1]
    %v253 = vld [vmem:[#allocation8 + $0x30] sm:$0xff]
    %v254 = vld [vmem:[#allocation8 + $0x38] sm:$0x1]
    %v255 = vld [vmem:[#allocation8 + $0x40] sm:$0xff]
    %v256 = vld [vmem:[#allocation8 + $0x48] sm:$0x1]
    %v257 = vld [vmem:[#allocation8 + $0x50] sm:$0xff]
    %v258 = vld [vmem:[#allocation8 + $0x58] sm:$0x1]
    %v259 = vld [vmem:[#allocation8 + $0x60] sm:$0xff]
    %v260 = vld [vmem:[#allocation8 + $0x68] sm:$0x1]
    %v261 = vld [vmem:[#allocation8 + $0x70] sm:$0xff]
    %v262 = vld [vmem:[#allocation8 + $0x78] sm:$0x1]
    %v263 = vld [vmem:[#allocation8 + $0x90] sm:$0xff]
    %v264 = vld [vmem:[#allocation8 + $0x98] sm:$0x1]
    %v265 = vld [vmem:[#allocation8 + $0xa0] sm:$0xff]
    %v266 = vld [vmem:[#allocation8 + $0xa8] sm:$0x1]
    %v267 = vld [vmem:[#allocation8 + $0xb0] sm:$0xff]
    %v268 = vld [vmem:[#allocation8 + $0xb8] sm:$0x1]
    %v269 = vld [vmem:[#allocation8 + $0xc0] sm:$0xff]
    %v270 = vld [vmem:[#allocation8 + $0xc8] sm:$0x1]
    %v271 = vld [vmem:[#allocation8 + $0xd0] sm:$0xff]
    %v272 = vld [vmem:[#allocation8 + $0xd8] sm:$0x1]
    %v273 = vld [vmem:[#allocation8 + $0xe0] sm:$0xff]
    %v274 = vld [vmem:[#allocation8 + $0xe8] sm:$0x1]
    %v275 = vld [vmem:[#allocation8 + $0xf0] sm:$0xff]
    %v276 = vld [vmem:[#allocation8 + $0xf8] sm:$0x1]
    %v277 = vld [vmem:[#allocation8 + $0x100] sm:$0xff]
    %v278 = vld [vmem:[#allocation8 + $0x108] sm:$0x1]
    %v279 = vld [vmem:[#allocation9] sm:$0xff]
    %v280 = vld [vmem:[#allocation9 + $0x10] sm:$0xff]
    %v281 = vld [vmem:[#allocation9 + $0x20] sm:$0xff]
    %v282 = vld [vmem:[#allocation9 + $0x30] sm:$0xff]
    %v283 = vld [vmem:[#allocation9 + $0x40] sm:$0xff]
    %v284 = vld [vmem:[#allocation9 + $0x50] sm:$0xff]
    %v285 = vld [vmem:[#allocation9 + $0x60] sm:$0xff]
    %v286 = vld [vmem:[#allocation9 + $0x70] sm:$0xff]
    %v287 = vld [vmem:[#allocation9 + $0x90] sm:$0xff]
    %v288 = vld [vmem:[#allocation9 + $0xa0] sm:$0xff]
    %v289 = vld [vmem:[#allocation9 + $0xb0] sm:$0xff]
    %v290 = vld [vmem:[#allocation9 + $0xc0] sm:$0xff]
    %v291 = vld [vmem:[#allocation9 + $0xd0] sm:$0xff]
    %v292 = vld [vmem:[#allocation9 + $0xe0] sm:$0xff]
    %v293 = vld [vmem:[#allocation9 + $0xf0] sm:$0xff]
    %v294 = vld [vmem:[#allocation9 + $0x100] sm:$0xff]
    %311 = vrot.lane.b32.xlu0 %v229, 4
    %v312 = vpop.permute.xlu0 %311
    %313 = vrot.lane.b32.xlu0 %v230, 4
    %v314 = vpop.permute.xlu0 %313
    %315 = vrot.lane.b32.xlu0 %v231, 4
    %v316 = vpop.permute.xlu0 %315
    %317 = vrot.lane.b32.xlu0 %v232, 4
    %v318 = vpop.permute.xlu0 %317
    %319 = vrot.lane.b32.xlu0 %v233, 4
    %v320 = vpop.permute.xlu0 %319
    %321 = vrot.lane.b32.xlu0 %v234, 4
    %v322 = vpop.permute.xlu0 %321
    %323 = vrot.lane.b32.xlu0 %v235, 4
    %v324 = vpop.permute.xlu0 %323
    %325 = vrot.lane.b32.xlu0 %v236, 4
    %v326 = vpop.permute.xlu0 %325
    %327 = vrot.lane.b32.xlu0 %v238, 4
    %v328 = vpop.permute.xlu0 %327
    %329 = vrot.lane.b32.xlu0 %v239, 4
    %v330 = vpop.permute.xlu0 %329
    %331 = vrot.lane.b32.xlu0 %v240, 4
    %v332 = vpop.permute.xlu0 %331
    %333 = vrot.lane.b32.xlu0 %v241, 4
    %v334 = vpop.permute.xlu0 %333
    %335 = vrot.lane.b32.xlu0 %v242, 4
    %v336 = vpop.permute.xlu0 %335
    %337 = vrot.lane.b32.xlu0 %v243, 4
    %v338 = vpop.permute.xlu0 %337
    %339 = vrot.lane.b32.xlu0 %v244, 4
    %v340 = vpop.permute.xlu0 %339
    %341 = vrot.lane.b32.xlu0 %v245, 4
    %v342 = vpop.permute.xlu0 %341
    %vm391 = vcmask 1046528
    %v392 = vrot.slane %v193, 1
    %v393 = vrot.slane %v194, 1
    %v394 = vsel %vm391, %v392, %v393
    %v395 = vrot.slane %v195, 1
    %v396 = vrot.slane %v196, 1
    %v397 = vsel %vm391, %v395, %v396
    %v398 = vrot.slane %v197, 1
    %v399 = vrot.slane %v198, 1
    %v400 = vsel %vm391, %v398, %v399
    %v401 = vrot.slane %v199, 1
    %v402 = vrot.slane %v200, 1
    %v403 = vsel %vm391, %v401, %v402
    %v404 = vrot.slane %v201, 1
    %v405 = vrot.slane %v202, 1
    %v406 = vsel %vm391, %v404, %v405
    %v407 = vrot.slane %v203, 1
    %v408 = vrot.slane %v204, 1
    %v409 = vsel %vm391, %v407, %v408
    %v410 = vrot.slane %v205, 1
    %v411 = vrot.slane %v206, 1
    %v412 = vsel %vm391, %v410, %v411
    %v413 = vrot.slane %v207, 1
    %v414 = vrot.slane %v208, 1
    %v415 = vsel %vm391, %v413, %v414
    %v416 = vrot.slane %v211, 1
    %v417 = vrot.slane %v212, 1
    %v418 = vsel %vm391, %v416, %v417
    %v419 = vrot.slane %v213, 1
    %v420 = vrot.slane %v214, 1
    %v421 = vsel %vm391, %v419, %v420
    %v422 = vrot.slane %v215, 1
    %v423 = vrot.slane %v216, 1
    %v424 = vsel %vm391, %v422, %v423
    %v425 = vrot.slane %v217, 1
    %v426 = vrot.slane %v218, 1
    %v427 = vsel %vm391, %v425, %v426
    %v428 = vrot.slane %v219, 1
    %v429 = vrot.slane %v220, 1
    %v430 = vsel %vm391, %v428, %v429
    %v431 = vrot.slane %v221, 1
    %v432 = vrot.slane %v222, 1
    %v433 = vsel %vm391, %v431, %v432
    %v434 = vrot.slane %v223, 1
    %v435 = vrot.slane %v224, 1
    %v436 = vsel %vm391, %v434, %v435
    %v437 = vrot.slane %v225, 1
    %v438 = vrot.slane %v226, 1
    %v439 = vsel %vm391, %v437, %v438
    %440 = vrot.lane.b32.xlu0 %v394, 8
    %v441 = vpop.permute.xlu0 %440
    %442 = vrot.lane.b32.xlu0 %v397, 8
    %v443 = vpop.permute.xlu0 %442
    %444 = vrot.lane.b32.xlu0 %v400, 8
    %v445 = vpop.permute.xlu0 %444
    %446 = vrot.lane.b32.xlu0 %v403, 8
    %v447 = vpop.permute.xlu0 %446
    %448 = vrot.lane.b32.xlu0 %v406, 8
    %v449 = vpop.permute.xlu0 %448
    %450 = vrot.lane.b32.xlu0 %v409, 8
    %v451 = vpop.permute.xlu0 %450
    %452 = vrot.lane.b32.xlu0 %v412, 8
    %v453 = vpop.permute.xlu0 %452
    %454 = vrot.lane.b32.xlu0 %v415, 8
    %v455 = vpop.permute.xlu0 %454
    %456 = vrot.lane.b32.xlu0 %v418, 8
    %v457 = vpop.permute.xlu0 %456
    %458 = vrot.lane.b32.xlu0 %v421, 8
    %v459 = vpop.permute.xlu0 %458
    %460 = vrot.lane.b32.xlu0 %v424, 8
    %v461 = vpop.permute.xlu0 %460
    %462 = vrot.lane.b32.xlu0 %v427, 8
    %v463 = vpop.permute.xlu0 %462
    %464 = vrot.lane.b32.xlu0 %v430, 8
    %v465 = vpop.permute.xlu0 %464
    %466 = vrot.lane.b32.xlu0 %v433, 8
    %v467 = vpop.permute.xlu0 %466
    %468 = vrot.lane.b32.xlu0 %v436, 8
    %v469 = vpop.permute.xlu0 %468
    %470 = vrot.lane.b32.xlu0 %v439, 8
    %v471 = vpop.permute.xlu0 %470
    %504 = vrot.lane.b32.xlu0 %v247, 12
    %v505 = vpop.permute.xlu0 %504
    %506 = vrot.lane.b32.xlu0 %v249, 12
    %v507 = vpop.permute.xlu0 %506
    %508 = vrot.lane.b32.xlu0 %v251, 12
    %v509 = vpop.permute.xlu0 %508
    %510 = vrot.lane.b32.xlu0 %v253, 12
    %v511 = vpop.permute.xlu0 %510
    %512 = vrot.lane.b32.xlu0 %v255, 12
    %v513 = vpop.permute.xlu0 %512
    %514 = vrot.lane.b32.xlu0 %v257, 12
    %v515 = vpop.permute.xlu0 %514
    %516 = vrot.lane.b32.xlu0 %v259, 12
    %v517 = vpop.permute.xlu0 %516
    %518 = vrot.lane.b32.xlu0 %v261, 12
    %v519 = vpop.permute.xlu0 %518
    %520 = vrot.lane.b32.xlu0 %v263, 12
    %v521 = vpop.permute.xlu0 %520
    %522 = vrot.lane.b32.xlu0 %v265, 12
    %v523 = vpop.permute.xlu0 %522
    %524 = vrot.lane.b32.xlu0 %v267, 12
    %v525 = vpop.permute.xlu0 %524
    %526 = vrot.lane.b32.xlu0 %v269, 12
    %v527 = vpop.permute.xlu0 %526
    %528 = vrot.lane.b32.xlu0 %v271, 12
    %v529 = vpop.permute.xlu0 %528
    %530 = vrot.lane.b32.xlu0 %v273, 12
    %v531 = vpop.permute.xlu0 %530
    %532 = vrot.lane.b32.xlu0 %v275, 12
    %v533 = vpop.permute.xlu0 %532
    %534 = vrot.lane.b32.xlu0 %v277, 12
    %v535 = vpop.permute.xlu0 %534
    %568 = vrot.lane.b32.xlu0 %v279, 16
    %v569 = vpop.permute.xlu0 %568
    %570 = vrot.lane.b32.xlu0 %v280, 16
    %v571 = vpop.permute.xlu0 %570
    %572 = vrot.lane.b32.xlu0 %v281, 16
    %v573 = vpop.permute.xlu0 %572
    %574 = vrot.lane.b32.xlu0 %v282, 16
    %v575 = vpop.permute.xlu0 %574
    %576 = vrot.lane.b32.xlu0 %v283, 16
    %v577 = vpop.permute.xlu0 %576
    %578 = vrot.lane.b32.xlu0 %v284, 16
    %v579 = vpop.permute.xlu0 %578
    %580 = vrot.lane.b32.xlu0 %v285, 16
    %v581 = vpop.permute.xlu0 %580
    %582 = vrot.lane.b32.xlu0 %v286, 16
    %v583 = vpop.permute.xlu0 %582
    %584 = vrot.lane.b32.xlu0 %v287, 16
    %v585 = vpop.permute.xlu0 %584
    %586 = vrot.lane.b32.xlu0 %v288, 16
    %v587 = vpop.permute.xlu0 %586
    %588 = vrot.lane.b32.xlu0 %v289, 16
    %v589 = vpop.permute.xlu0 %588
    %590 = vrot.lane.b32.xlu0 %v290, 16
    %v591 = vpop.permute.xlu0 %590
    %592 = vrot.lane.b32.xlu0 %v291, 16
    %v593 = vpop.permute.xlu0 %592
    %594 = vrot.lane.b32.xlu0 %v292, 16
    %v595 = vpop.permute.xlu0 %594
    %596 = vrot.lane.b32.xlu0 %v293, 16
    %v597 = vpop.permute.xlu0 %596
    %598 = vrot.lane.b32.xlu0 %v294, 16
    %v599 = vpop.permute.xlu0 %598
    %v632 = vrot.slane %v247, 1
    %v633 = vrot.slane %v248, 1
    %v634 = vsel %vm391, %v632, %v633
    %v635 = vrot.slane %v249, 1
    %v636 = vrot.slane %v250, 1
    %v637 = vsel %vm391, %v635, %v636
    %v638 = vrot.slane %v251, 1
    %v639 = vrot.slane %v252, 1
    %v640 = vsel %vm391, %v638, %v639
    %v641 = vrot.slane %v253, 1
    %v642 = vrot.slane %v254, 1
    %v643 = vsel %vm391, %v641, %v642
    %v644 = vrot.slane %v255, 1
    %v645 = vrot.slane %v256, 1
    %v646 = vsel %vm391, %v644, %v645
    %v647 = vrot.slane %v257, 1
    %v648 = vrot.slane %v258, 1
    %v649 = vsel %vm391, %v647, %v648
    %v650 = vrot.slane %v259, 1
    %v651 = vrot.slane %v260, 1
    %v652 = vsel %vm391, %v650, %v651
    %v653 = vrot.slane %v261, 1
    %v654 = vrot.slane %v262, 1
    %v655 = vsel %vm391, %v653, %v654
    %v656 = vrot.slane %v263, 1
    %v657 = vrot.slane %v264, 1
    %v658 = vsel %vm391, %v656, %v657
    %v659 = vrot.slane %v265, 1
    %v660 = vrot.slane %v266, 1
    %v661 = vsel %vm391, %v659, %v660
    %v662 = vrot.slane %v267, 1
    %v663 = vrot.slane %v268, 1
    %v664 = vsel %vm391, %v662, %v663
    %v665 = vrot.slane %v269, 1
    %v666 = vrot.slane %v270, 1
    %v667 = vsel %vm391, %v665, %v666
    %v668 = vrot.slane %v271, 1
    %v669 = vrot.slane %v272, 1
    %v670 = vsel %vm391, %v668, %v669
    %v671 = vrot.slane %v273, 1
    %v672 = vrot.slane %v274, 1
    %v673 = vsel %vm391, %v671, %v672
    %v674 = vrot.slane %v275, 1
    %v675 = vrot.slane %v276, 1
    %v676 = vsel %vm391, %v674, %v675
    %v677 = vrot.slane %v277, 1
    %v678 = vrot.slane %v278, 1
    %v679 = vsel %vm391, %v677, %v678
    %680 = vrot.lane.b32.xlu0 %v634, 20
    %v681 = vpop.permute.xlu0 %680
    %682 = vrot.lane.b32.xlu0 %v637, 20
    %v683 = vpop.permute.xlu0 %682
    %684 = vrot.lane.b32.xlu0 %v640, 20
    %v685 = vpop.permute.xlu0 %684
    %686 = vrot.lane.b32.xlu0 %v643, 20
    %v687 = vpop.permute.xlu0 %686
    %688 = vrot.lane.b32.xlu0 %v646, 20
    %v689 = vpop.permute.xlu0 %688
    %690 = vrot.lane.b32.xlu0 %v649, 20
    %v691 = vpop.permute.xlu0 %690
    %692 = vrot.lane.b32.xlu0 %v652, 20
    %v693 = vpop.permute.xlu0 %692
    %694 = vrot.lane.b32.xlu0 %v655, 20
    %v695 = vpop.permute.xlu0 %694
    %696 = vrot.lane.b32.xlu0 %v658, 20
    %v697 = vpop.permute.xlu0 %696
    %698 = vrot.lane.b32.xlu0 %v661, 20
    %v699 = vpop.permute.xlu0 %698
    %700 = vrot.lane.b32.xlu0 %v664, 20
    %v701 = vpop.permute.xlu0 %700
    %702 = vrot.lane.b32.xlu0 %v667, 20
    %v703 = vpop.permute.xlu0 %702
    %704 = vrot.lane.b32.xlu0 %v670, 20
    %v705 = vpop.permute.xlu0 %704
    %706 = vrot.lane.b32.xlu0 %v673, 20
    %v707 = vpop.permute.xlu0 %706
    %708 = vrot.lane.b32.xlu0 %v676, 20
    %v709 = vpop.permute.xlu0 %708
    %710 = vrot.lane.b32.xlu0 %v679, 20
    %v711 = vpop.permute.xlu0 %710
    %730 = vrot.lane.b32.xlu0 %v195, 24
    %v731 = vpop.permute.xlu0 %730
    %732 = vrot.lane.b32.xlu0 %v197, 24
    %v733 = vpop.permute.xlu0 %732
    %734 = vrot.lane.b32.xlu0 %v199, 24
    %v735 = vpop.permute.xlu0 %734
    %736 = vrot.lane.b32.xlu0 %v201, 24
    %v737 = vpop.permute.xlu0 %736
    %738 = vrot.lane.b32.xlu0 %v203, 24
    %v739 = vpop.permute.xlu0 %738
    %740 = vrot.lane.b32.xlu0 %v205, 24
    %v741 = vpop.permute.xlu0 %740
    %742 = vrot.lane.b32.xlu0 %v207, 24
    %v743 = vpop.permute.xlu0 %742
    %744 = vrot.lane.b32.xlu0 %v209, 24
    %v745 = vpop.permute.xlu0 %744
    %746 = vrot.lane.b32.xlu0 %v213, 24
    %v747 = vpop.permute.xlu0 %746
    %748 = vrot.lane.b32.xlu0 %v215, 24
    %v749 = vpop.permute.xlu0 %748
    %750 = vrot.lane.b32.xlu0 %v217, 24
    %v751 = vpop.permute.xlu0 %750
    %752 = vrot.lane.b32.xlu0 %v219, 24
    %v753 = vpop.permute.xlu0 %752
    %754 = vrot.lane.b32.xlu0 %v221, 24
    %v755 = vpop.permute.xlu0 %754
    %756 = vrot.lane.b32.xlu0 %v223, 24
    %v757 = vpop.permute.xlu0 %756
    %758 = vrot.lane.b32.xlu0 %v225, 24
    %v759 = vpop.permute.xlu0 %758
    %760 = vrot.lane.b32.xlu0 %v227, 24
    %v761 = vpop.permute.xlu0 %760
    %780 = vrot.lane.b32.xlu0 %v230, 28
    %v781 = vpop.permute.xlu0 %780
    %782 = vrot.lane.b32.xlu0 %v231, 28
    %v783 = vpop.permute.xlu0 %782
    %784 = vrot.lane.b32.xlu0 %v232, 28
    %v785 = vpop.permute.xlu0 %784
    %786 = vrot.lane.b32.xlu0 %v233, 28
    %v787 = vpop.permute.xlu0 %786
    %788 = vrot.lane.b32.xlu0 %v234, 28
    %v789 = vpop.permute.xlu0 %788
    %790 = vrot.lane.b32.xlu0 %v235, 28
    %v791 = vpop.permute.xlu0 %790
    %792 = vrot.lane.b32.xlu0 %v236, 28
    %v793 = vpop.permute.xlu0 %792
    %794 = vrot.lane.b32.xlu0 %v237, 28
    %v795 = vpop.permute.xlu0 %794
    %796 = vrot.lane.b32.xlu0 %v239, 28
    %v797 = vpop.permute.xlu0 %796
    %798 = vrot.lane.b32.xlu0 %v240, 28
    %v799 = vpop.permute.xlu0 %798
    %800 = vrot.lane.b32.xlu0 %v241, 28
    %v801 = vpop.permute.xlu0 %800
    %802 = vrot.lane.b32.xlu0 %v242, 28
    %v803 = vpop.permute.xlu0 %802
    %804 = vrot.lane.b32.xlu0 %v243, 28
    %v805 = vpop.permute.xlu0 %804
    %806 = vrot.lane.b32.xlu0 %v244, 28
    %v807 = vpop.permute.xlu0 %806
    %808 = vrot.lane.b32.xlu0 %v245, 28
    %v809 = vpop.permute.xlu0 %808
    %810 = vrot.lane.b32.xlu0 %v246, 28
    %v811 = vpop.permute.xlu0 %810
    %v830 = vrot.slane %v209, 1
    %v831 = vrot.slane %v210, 1
    %v832 = vsel %vm391, %v830, %v831
    %v833 = vrot.slane %v227, 1
    %v834 = vrot.slane %v228, 1
    %v835 = vsel %vm391, %v833, %v834
    %836 = vrot.lane.b32.xlu0 %v397, 32
    %v837 = vpop.permute.xlu0 %836
    %838 = vrot.lane.b32.xlu0 %v400, 32
    %v839 = vpop.permute.xlu0 %838
    %840 = vrot.lane.b32.xlu0 %v403, 32
    %v841 = vpop.permute.xlu0 %840
    %842 = vrot.lane.b32.xlu0 %v406, 32
    %v843 = vpop.permute.xlu0 %842
    %844 = vrot.lane.b32.xlu0 %v409, 32
    %v845 = vpop.permute.xlu0 %844
    %846 = vrot.lane.b32.xlu0 %v412, 32
    %v847 = vpop.permute.xlu0 %846
    %848 = vrot.lane.b32.xlu0 %v415, 32
    %v849 = vpop.permute.xlu0 %848
    %850 = vrot.lane.b32.xlu0 %v832, 32
    %v851 = vpop.permute.xlu0 %850
    %852 = vrot.lane.b32.xlu0 %v421, 32
    %v853 = vpop.permute.xlu0 %852
    %854 = vrot.lane.b32.xlu0 %v424, 32
    %v855 = vpop.permute.xlu0 %854
    %856 = vrot.lane.b32.xlu0 %v427, 32
    %v857 = vpop.permute.xlu0 %856
    %858 = vrot.lane.b32.xlu0 %v430, 32
    %v859 = vpop.permute.xlu0 %858
    %860 = vrot.lane.b32.xlu0 %v433, 32
    %v861 = vpop.permute.xlu0 %860
    %862 = vrot.lane.b32.xlu0 %v436, 32
    %v863 = vpop.permute.xlu0 %862
    %864 = vrot.lane.b32.xlu0 %v439, 32
    %v865 = vpop.permute.xlu0 %864
    %866 = vrot.lane.b32.xlu0 %v835, 32
    %v867 = vpop.permute.xlu0 %866
    %vm884 = vcmask 31744
    %v885 = vsel %vm884, %v193, %v312
    %v886 = vsel %vm884, %v195, %v314
    %v887 = vsel %vm884, %v197, %v316
    %v888 = vsel %vm884, %v199, %v318
    %v889 = vsel %vm884, %v201, %v320
    %v890 = vsel %vm884, %v203, %v322
    %v891 = vsel %vm884, %v205, %v324
    %v892 = vsel %vm884, %v207, %v326
    %v893 = vsel %vm884, %v211, %v328
    %v894 = vsel %vm884, %v213, %v330
    %v895 = vsel %vm884, %v215, %v332
    %v896 = vsel %vm884, %v217, %v334
    %v897 = vsel %vm884, %v219, %v336
    %v898 = vsel %vm884, %v221, %v338
    %v899 = vsel %vm884, %v223, %v340
    %v900 = vsel %vm884, %v225, %v342
    %vm901 = vcmask 64512
    %v902 = vsel %vm901, %v885, %v441
    %v903 = vsel %vm901, %v886, %v443
    %v904 = vsel %vm901, %v887, %v445
    %v905 = vsel %vm901, %v888, %v447
    %v906 = vsel %vm901, %v889, %v449
    %v907 = vsel %vm901, %v890, %v451
    %v908 = vsel %vm901, %v891, %v453
    %v909 = vsel %vm901, %v892, %v455
    %v910 = vsel %vm901, %v893, %v457
    %v911 = vsel %vm901, %v894, %v459
    %v912 = vsel %vm901, %v895, %v461
    %v913 = vsel %vm901, %v896, %v463
    %v914 = vsel %vm901, %v897, %v465
    %v915 = vsel %vm901, %v898, %v467
    %v916 = vsel %vm901, %v899, %v469
    %v917 = vsel %vm901, %v900, %v471
    %vm918 = vcmask 97280
    %v919 = vsel %vm918, %v902, %v505
    %v920 = vsel %vm918, %v903, %v507
    %v921 = vsel %vm918, %v904, %v509
    %v922 = vsel %vm918, %v905, %v511
    %v923 = vsel %vm918, %v906, %v513
    %v924 = vsel %vm918, %v907, %v515
    %v925 = vsel %vm918, %v908, %v517
    %v926 = vsel %vm918, %v909, %v519
    %v927 = vsel %vm918, %v910, %v521
    %v928 = vsel %vm918, %v911, %v523
    %v929 = vsel %vm918, %v912, %v525
    %v930 = vsel %vm918, %v913, %v527
    %v931 = vsel %vm918, %v914, %v529
    %v932 = vsel %vm918, %v915, %v531
    %v933 = vsel %vm918, %v916, %v533
    %v934 = vsel %vm918, %v917, %v535
    %vm935 = vcmask 130048
    %v936 = vsel %vm935, %v919, %v569
    %v937 = vsel %vm935, %v920, %v571
    %v938 = vsel %vm935, %v921, %v573
    %v939 = vsel %vm935, %v922, %v575
    %v940 = vsel %vm935, %v923, %v577
    %v941 = vsel %vm935, %v924, %v579
    %v942 = vsel %vm935, %v925, %v581
    %v943 = vsel %vm935, %v926, %v583
    %v944 = vsel %vm935, %v927, %v585
    %v945 = vsel %vm935, %v928, %v587
    %v946 = vsel %vm935, %v929, %v589
    %v947 = vsel %vm935, %v930, %v591
    %v948 = vsel %vm935, %v931, %v593
    %v949 = vsel %vm935, %v932, %v595
    %v950 = vsel %vm935, %v933, %v597
    %v951 = vsel %vm935, %v934, %v599
    %vm952 = vcmask 162816
    %v953 = vsel %vm952, %v936, %v681
    %v954 = vsel %vm952, %v937, %v683
    %v955 = vsel %vm952, %v938, %v685
    %v956 = vsel %vm952, %v939, %v687
    %v957 = vsel %vm952, %v940, %v689
    %v958 = vsel %vm952, %v941, %v691
    %v959 = vsel %vm952, %v942, %v693
    %v960 = vsel %vm952, %v943, %v695
    %v961 = vsel %vm952, %v944, %v697
    %v962 = vsel %vm952, %v945, %v699
    %v963 = vsel %vm952, %v946, %v701
    %v964 = vsel %vm952, %v947, %v703
    %v965 = vsel %vm952, %v948, %v705
    %v966 = vsel %vm952, %v949, %v707
    %v967 = vsel %vm952, %v950, %v709
    %v968 = vsel %vm952, %v951, %v711
    %vm969 = vcmask 195584
    %v970 = vsel %vm969, %v953, %v731
    %v971 = vsel %vm969, %v954, %v733
    %v972 = vsel %vm969, %v955, %v735
    %v973 = vsel %vm969, %v956, %v737
    %v974 = vsel %vm969, %v957, %v739
    %v975 = vsel %vm969, %v958, %v741
    %v976 = vsel %vm969, %v959, %v743
    %v977 = vsel %vm969, %v960, %v745
    %v978 = vsel %vm969, %v961, %v747
    %v979 = vsel %vm969, %v962, %v749
    %v980 = vsel %vm969, %v963, %v751
    %v981 = vsel %vm969, %v964, %v753
    %v982 = vsel %vm969, %v965, %v755
    %v983 = vsel %vm969, %v966, %v757
    %v984 = vsel %vm969, %v967, %v759
    %v985 = vsel %vm969, %v968, %v761
    %vm986 = vcmask 228352
    %v987 = vsel %vm986, %v970, %v781
    %v988 = vsel %vm986, %v971, %v783
    %v989 = vsel %vm986, %v972, %v785
    %v990 = vsel %vm986, %v973, %v787
    %v991 = vsel %vm986, %v974, %v789
    %v992 = vsel %vm986, %v975, %v791
    %v993 = vsel %vm986, %v976, %v793
    %v994 = vsel %vm986, %v977, %v795
    %v995 = vsel %vm986, %v978, %v797
    %v996 = vsel %vm986, %v979, %v799
    %v997 = vsel %vm986, %v980, %v801
    %v998 = vsel %vm986, %v981, %v803
    %v999 = vsel %vm986, %v982, %v805
    %v1000 = vsel %vm986, %v983, %v807
    %v1001 = vsel %vm986, %v984, %v809
    %v1002 = vsel %vm986, %v985, %v811
    %vm1003 = vcmask 261120
    %v1004 = vsel %vm1003, %v987, %v837
    %v1005 = vsel %vm1003, %v988, %v839
    %v1006 = vsel %vm1003, %v989, %v841
    %v1007 = vsel %vm1003, %v990, %v843
    %v1008 = vsel %vm1003, %v991, %v845
    %v1009 = vsel %vm1003, %v992, %v847
    %v1010 = vsel %vm1003, %v993, %v849
    %v1011 = vsel %vm1003, %v994, %v851
    %v1012 = vsel %vm1003, %v995, %v853
    %v1013 = vsel %vm1003, %v996, %v855
    %v1014 = vsel %vm1003, %v997, %v857
    %v1015 = vsel %vm1003, %v998, %v859
    %v1016 = vsel %vm1003, %v999, %v861
    %v1017 = vsel %vm1003, %v1000, %v863
    %v1018 = vsel %vm1003, %v1001, %v865
    %v1019 = vsel %vm1003, %v1002, %v867
    %v1020 = vld [vmem:[#allocation11] sm:$0xff]
    %v1021 = vld [vmem:[#allocation11 + $0x8] sm:$0xff]
    %v1022 = vld [vmem:[#allocation11 + $0x10] sm:$0xff]
    %v1023 = vld [vmem:[#allocation11 + $0x18] sm:$0xff]
    %v1024 = vld [vmem:[#allocation11 + $0x20] sm:$0xf]
    %vm1025 = vcmask 293888
    %v1027 = vsel %vm1025, %v1004, 0
    %v1030 = vsel %vm1025, %v1005, 0
    %v1033 = vsel %vm1025, %v1006, 0
    %v1036 = vsel %vm1025, %v1007, 0
    %v1039 = vsel %vm1025, %v1008, 0
    %v1042 = vsel %vm1025, %v1009, 0
    %v1045 = vsel %vm1025, %v1010, 0
    %v1048 = vsel %vm1025, %v1011, 0
    %v1051 = vsel %vm1025, %v1012, 0
    %v1054 = vsel %vm1025, %v1013, 0
    %v1057 = vsel %vm1025, %v1014, 0
    %v1060 = vsel %vm1025, %v1015, 0
    %v1063 = vsel %vm1025, %v1016, 0
    %v1066 = vsel %vm1025, %v1017, 0
    %v1069 = vsel %vm1025, %v1018, 0
    %v1072 = vsel %vm1025, %v1019, 0
    %vm1074 = vcmask 1043456
    %v1076 = vsel %vm1074, %v1024, 0
    %1078 = vmatprep.subr.mxu0 0.0
    %1079 = vmatpush1.msra.mxu0 %v1020
    %1080 = vmatprep.subr.mxu0 0.0
    %1081 = vmatpush1.msra.mxu0 %v1021
    %1082 = vmatprep.subr.mxu0 0.0
    %1083 = vmatpush1.msra.mxu0 %v1022
    %1084 = vmatprep.subr.mxu0 0.0
    %1085 = vmatpush1.msra.mxu0 %v1023
    %1086 = vmatprep.subr.mxu0 0.0
    %1087 = vmatpush1.msra.mxu0 %v1076
    %1088 = vmatprep.subr.mxu0 0.0
    %1089 = vmatpush1.msra.mxu0 0.0
    %1090 = vmatprep.subr.mxu0 0.0
    %1091 = vmatpush1.msra.mxu0 0.0
    %1092 = vmatprep.subr.mxu0 0.0
    %1093 = vmatpush1.msra.mxu0 0.0
    %1094 = vmatprep.subr.mxu0 0.0
    %1095 = vmatpush1.msra.mxu0 0.0
    %1096 = vmatprep.subr.mxu0 0.0
    %1097 = vmatpush1.msra.mxu0 0.0
    %1098 = vmatprep.subr.mxu0 0.0
    %1099 = vmatpush1.msra.mxu0 0.0
    %1100 = vmatprep.subr.mxu0 0.0
    %1101 = vmatpush1.msra.mxu0 0.0
    %1102 = vmatprep.subr.mxu0 0.0
    %1103 = vmatpush1.msra.mxu0 0.0
    %1104 = vmatprep.subr.mxu0 0.0
    %1105 = vmatpush1.msra.mxu0 0.0
    %1106 = vmatprep.subr.mxu0 0.0
    %1107 = vmatpush1.msra.mxu0 0.0
    %1108 = vmatprep.subr.mxu0 0.0
    %1109 = vmatpush1.msra.mxu0 0.0
    %1110 = vmatprep.subr.mxu0 0.0
    %1111 = vmatpush1.msra.mxu0 0.0
    %1112 = vmatprep.subr.mxu0 0.0
    %1113 = vmatpush1.msra.mxu0 0.0
    %1114 = vmatprep.subr.mxu0 0.0
    %1115 = vmatpush1.msra.mxu0 0.0
    %1116 = vmatprep.subr.mxu0 0.0
    %1117 = vmatpush1.msra.mxu0 0.0
    %1118 = vmatprep.subr.mxu0 0.0
    %1119 = vmatpush1.msra.mxu0 0.0
    %1120 = vmatprep.subr.mxu0 0.0
    %1121 = vmatpush1.msra.mxu0 0.0
    %1122 = vmatprep.subr.mxu0 0.0
    %1123 = vmatpush1.msra.mxu0 0.0
    %1124 = vmatprep.subr.mxu0 0.0
    %1125 = vmatpush1.msra.mxu0 0.0
    %1126 = vmatprep.subr.mxu0 0.0
    %1127 = vmatpush1.msra.mxu0 0.0
    %1128 = vmatprep.subr.mxu0 0.0
    %1129 = vmatpush1.msra.mxu0 0.0
    %1130 = vmatprep.subr.mxu0 0.0
    %1131 = vmatpush1.msra.mxu0 0.0
    %1132 = vmatprep.subr.mxu0 0.0
    %1133 = vmatpush1.msra.mxu0 0.0
    %1134 = vmatprep.subr.mxu0 0.0
    %1135 = vmatpush1.msra.mxu0 0.0
    %1136 = vmatprep.subr.mxu0 0.0
    %1137 = vmatpush1.msra.mxu0 0.0
    %1138 = vmatprep.subr.mxu0 0.0
    %1139 = vmatpush1.msra.mxu0 0.0
    %1140 = vmatprep.subr.mxu0 0.0
    %1141 = vmatpush1.msra.mxu0 0.0
    %1142 = vmatprep.mubr.f32.mxu0 0.0
    %1143 = vmatmul.mubr.f32.gmra.mrb[0].mxu0 %v1027
    %v1144 = vpop.f32.mrb[0].mxu0
    %v1145 = vadd.f32 0.0, %v1144
    %v1146 = vpop.f32.mrb[0].mxu0
    %1147 = vmatprep.mubr.f32.mxu0 0.0
    %1148 = vmatmul.mubr.f32.gmra.mrb[0].mxu0 %v1030
    %v1149 = vpop.f32.mrb[0].mxu0
    %v1150 = vadd.f32 0.0, %v1149
    %v1151 = vpop.f32.mrb[0].mxu0
    %1152 = vmatprep.mubr.f32.mxu0 0.0
    %1153 = vmatmul.mubr.f32.gmra.mrb[0].mxu0 %v1033
    %v1154 = vpop.f32.mrb[0].mxu0
    %v1155 = vadd.f32 0.0, %v1154
    %v1156 = vpop.f32.mrb[0].mxu0
    %1157 = vmatprep.mubr.f32.mxu0 0.0
    %1158 = vmatmul.mubr.f32.gmra.mrb[0].mxu0 %v1036
    %v1159 = vpop.f32.mrb[0].mxu0
    %v1160 = vadd.f32 0.0, %v1159
    %v1161 = vpop.f32.mrb[0].mxu0
    %1162 = vmatprep.mubr.f32.mxu0 0.0
    %1163 = vmatmul.mubr.f32.gmra.mrb[0].mxu0 %v1039
    %v1164 = vpop.f32.mrb[0].mxu0
    %v1165 = vadd.f32 0.0, %v1164
    %v1166 = vpop.f32.mrb[0].mxu0
    %1167 = vmatprep.mubr.f32.mxu0 0.0
    %1168 = vmatmul.mubr.f32.gmra.mrb[0].mxu0 %v1042
    %v1169 = vpop.f32.mrb[0].mxu0
    %v1170 = vadd.f32 0.0, %v1169
    %v1171 = vpop.f32.mrb[0].mxu0
    %1172 = vmatprep.mubr.f32.mxu0 0.0
    %1173 = vmatmul.mubr.f32.gmra.mrb[0].mxu0 %v1045
    %v1174 = vpop.f32.mrb[0].mxu0
    %v1175 = vadd.f32 0.0, %v1174
    %v1176 = vpop.f32.mrb[0].mxu0
    %1177 = vmatprep.mubr.f32.mxu0 0.0
    %1178 = vmatmul.mubr.f32.gmra.mrb[0].mxu0 %v1048
    %v1179 = vpop.f32.mrb[0].mxu0
    %v1180 = vadd.f32 0.0, %v1179
    %v1181 = vpop.f32.mrb[0].mxu0
    %1182 = vmatprep.mubr.f32.mxu0 0.0
    %1183 = vmatmul.mubr.f32.gmra.mrb[0].mxu0 %v1051
    %v1184 = vpop.f32.mrb[0].mxu0
    %v1185 = vadd.f32 0.0, %v1184
    %v1186 = vpop.f32.mrb[0].mxu0
    %1187 = vmatprep.mubr.f32.mxu0 0.0
    %1188 = vmatmul.mubr.f32.gmra.mrb[0].mxu0 %v1054
    %v1189 = vpop.f32.mrb[0].mxu0
    %v1190 = vadd.f32 0.0, %v1189
    %v1191 = vpop.f32.mrb[0].mxu0
    %1192 = vmatprep.mubr.f32.mxu0 0.0
    %1193 = vmatmul.mubr.f32.gmra.mrb[0].mxu0 %v1057
    %v1194 = vpop.f32.mrb[0].mxu0
    %v1195 = vadd.f32 0.0, %v1194
    %v1196 = vpop.f32.mrb[0].mxu0
    %1197 = vmatprep.mubr.f32.mxu0 0.0
    %1198 = vmatmul.mubr.f32.gmra.mrb[0].mxu0 %v1060
    %v1199 = vpop.f32.mrb[0].mxu0
    %v1200 = vadd.f32 0.0, %v1199
    %v1201 = vpop.f32.mrb[0].mxu0
    %1202 = vmatprep.mubr.f32.mxu0 0.0
    %1203 = vmatmul.mubr.f32.gmra.mrb[0].mxu0 %v1063
    %v1204 = vpop.f32.mrb[0].mxu0
    %v1205 = vadd.f32 0.0, %v1204
    %v1206 = vpop.f32.mrb[0].mxu0
    %1207 = vmatprep.mubr.f32.mxu0 0.0
    %1208 = vmatmul.mubr.f32.gmra.mrb[0].mxu0 %v1066
    %v1209 = vpop.f32.mrb[0].mxu0
    %v1210 = vadd.f32 0.0, %v1209
    %v1211 = vpop.f32.mrb[0].mxu0
    %1212 = vmatprep.mubr.f32.mxu0 0.0
    %1213 = vmatmul.mubr.f32.gmra.mrb[0].mxu0 %v1069
    %v1214 = vpop.f32.mrb[0].mxu0
    %v1215 = vadd.f32 0.0, %v1214
    %v1216 = vpop.f32.mrb[0].mxu0
    %1217 = vmatprep.mubr.f32.mxu0 0.0
    %1218 = vmatmul.mubr.f32.gmra.mrb[0].mxu0 %v1072
    %v1219 = vpop.f32.mrb[0].mxu0
    %v1220 = vadd.f32 0.0, %v1219
    %v1221 = vpop.f32.mrb[0].mxu0
    %1222 = vdwg.mxu0
    %v1223 = vld [vmem:[#allocation12] sm:$0x1]
    %v1224 = vld [vmem:[#allocation14] sm:$0x1]
    %v1225 = vsel %vm901, %v1145, 0.0
    %v1226 = vsel %vm901, %v1150, 0.0
    %v1227 = vadd.f32 %v1225, %v1226
    %v1228 = vsel %vm901, %v1155, 0.0
    %v1229 = vadd.f32 %v1227, %v1228
    %v1230 = vsel %vm901, %v1160, 0.0
    %v1231 = vadd.f32 %v1229, %v1230
    %v1232 = vsel %vm901, %v1165, 0.0
    %v1233 = vadd.f32 %v1231, %v1232
    %v1234 = vsel %vm901, %v1170, 0.0
    %v1235 = vadd.f32 %v1233, %v1234
    %v1236 = vsel %vm901, %v1175, 0.0
    %v1237 = vadd.f32 %v1235, %v1236
    %v1238 = vsel %vm901, %v1180, 0.0
    %v1239 = vadd.f32 %v1237, %v1238
    %v1240 = vsel %vm901, %v1185, 0.0
    %v1241 = vadd.f32 %v1239, %v1240
    %v1242 = vsel %vm901, %v1190, 0.0
    %v1243 = vadd.f32 %v1241, %v1242
    %v1244 = vsel %vm901, %v1195, 0.0
    %v1245 = vadd.f32 %v1243, %v1244
    %v1246 = vsel %vm901, %v1200, 0.0
    %v1247 = vadd.f32 %v1245, %v1246
    %v1248 = vsel %vm901, %v1205, 0.0
    %v1249 = vadd.f32 %v1247, %v1248
    %v1250 = vsel %vm901, %v1210, 0.0
    %v1251 = vadd.f32 %v1249, %v1250
    %v1252 = vsel %vm901, %v1215, 0.0
    %v1253 = vadd.f32 %v1251, %v1252
    %v1254 = vsel %vm901, %v1220, 0.0
    %v1255 = vadd.f32 %v1253, %v1254
    %v1256 = vrot.slane %v1255, 4
    %v1257 = vadd.f32 %v1255, %v1256
    %v1258 = vrot.slane %v1257, 2
    %v1259 = vadd.f32 %v1257, %v1258
    %v1260 = vrot.slane %v1259, 1
    %v1261 = vadd.f32 %v1259, %v1260
    %v1262 = vmul.f32 %v1261, 0.0078125
    %v1263 = vmul.f32 %v1145, %v1145
    %v1264 = vmul.f32 %v1150, %v1150
    %v1265 = vmul.f32 %v1155, %v1155
    %v1266 = vmul.f32 %v1160, %v1160
    %v1267 = vmul.f32 %v1165, %v1165
    %v1268 = vmul.f32 %v1170, %v1170
    %v1269 = vmul.f32 %v1175, %v1175
    %v1270 = vmul.f32 %v1180, %v1180
    %v1271 = vmul.f32 %v1185, %v1185
    %v1272 = vmul.f32 %v1190, %v1190
    %v1273 = vmul.f32 %v1195, %v1195
    %v1274 = vmul.f32 %v1200, %v1200
    %v1275 = vmul.f32 %v1205, %v1205
    %v1276 = vmul.f32 %v1210, %v1210
    %v1277 = vmul.f32 %v1215, %v1215
    %v1278 = vmul.f32 %v1220, %v1220
    %v1279 = vsel %vm901, %v1263, 0.0
    %v1280 = vsel %vm901, %v1264, 0.0
    %v1281 = vadd.f32 %v1279, %v1280
    %v1282 = vsel %vm901, %v1265, 0.0
    %v1283 = vadd.f32 %v1281, %v1282
    %v1284 = vsel %vm901, %v1266, 0.0
    %v1285 = vadd.f32 %v1283, %v1284
    %v1286 = vsel %vm901, %v1267, 0.0
    %v1287 = vadd.f32 %v1285, %v1286
    %v1288 = vsel %vm901, %v1268, 0.0
    %v1289 = vadd.f32 %v1287, %v1288
    %v1290 = vsel %vm901, %v1269, 0.0
    %v1291 = vadd.f32 %v1289, %v1290
    %v1292 = vsel %vm901, %v1270, 0.0
    %v1293 = vadd.f32 %v1291, %v1292
    %v1294 = vsel %vm901, %v1271, 0.0
    %v1295 = vadd.f32 %v1293, %v1294
    %v1296 = vsel %vm901, %v1272, 0.0
    %v1297 = vadd.f32 %v1295, %v1296
    %v1298 = vsel %vm901, %v1273, 0.0
    %v1299 = vadd.f32 %v1297, %v1298
    %v1300 = vsel %vm901, %v1274, 0.0
    %v1301 = vadd.f32 %v1299, %v1300
    %v1302 = vsel %vm901, %v1275, 0.0
    %v1303 = vadd.f32 %v1301, %v1302
    %v1304 = vsel %vm901, %v1276, 0.0
    %v1305 = vadd.f32 %v1303, %v1304
    %v1306 = vsel %vm901, %v1277, 0.0
    %v1307 = vadd.f32 %v1305, %v1306
    %v1308 = vsel %vm901, %v1278, 0.0
    %v1309 = vadd.f32 %v1307, %v1308
    %v1310 = vrot.slane %v1309, 4
    %v1311 = vadd.f32 %v1309, %v1310
    %v1312 = vrot.slane %v1311, 2
    %v1313 = vadd.f32 %v1311, %v1312
    %v1314 = vrot.slane %v1313, 1
    %v1315 = vadd.f32 %v1313, %v1314
    %v1316 = vmul.f32 %v1315, 0.0078125
    %v1317 = vmul.f32 %v1262, %v1262
    %v1318 = vsub.f32 %v1316, %v1317
    %v1319 = vadd.f32 %v1318, 1e-05
    %v1320 = vrsqrt.pop %v1319
    %v1321 = vmul.f32 %v1223, %v1320
    %v1322 = vmul.f32 %v1262, %v1321
    %v1323 = vsub.f32 %v1224, %v1322
    %v1325 = vlaneseq
    %v1326 = vshrl.u32 %v1325, 7
    %v1327 = vsub.s32 0, %v1326
    %v1328 = vrot.slane %v1321, %v1327
    %v1330 = vmul.f32 %v1145, %v1328
    %v1331 = vmul.f32 %v1150, %v1328
    %v1332 = vmul.f32 %v1155, %v1328
    %v1333 = vmul.f32 %v1160, %v1328
    %v1334 = vmul.f32 %v1165, %v1328
    %v1335 = vmul.f32 %v1170, %v1328
    %v1336 = vmul.f32 %v1175, %v1328
    %v1337 = vmul.f32 %v1180, %v1328
    %v1338 = vmul.f32 %v1185, %v1328
    %v1339 = vmul.f32 %v1190, %v1328
    %v1340 = vmul.f32 %v1195, %v1328
    %v1341 = vmul.f32 %v1200, %v1328
    %v1342 = vmul.f32 %v1205, %v1328
    %v1343 = vmul.f32 %v1210, %v1328
    %v1344 = vmul.f32 %v1215, %v1328
    %v1345 = vmul.f32 %v1220, %v1328
    %v1347 = vlaneseq
    %v1348 = vshrl.u32 %v1347, 7
    %v1349 = vsub.s32 0, %v1348
    %v1350 = vrot.slane %v1323, %v1349
    %v1352 = vadd.f32 %v1330, %v1350
    %v1353 = vadd.f32 %v1331, %v1350
    %v1354 = vadd.f32 %v1332, %v1350
    %v1355 = vadd.f32 %v1333, %v1350
    %v1356 = vadd.f32 %v1334, %v1350
    %v1357 = vadd.f32 %v1335, %v1350
    %v1358 = vadd.f32 %v1336, %v1350
    %v1359 = vadd.f32 %v1337, %v1350
    %v1360 = vadd.f32 %v1338, %v1350
    %v1361 = vadd.f32 %v1339, %v1350
    %v1362 = vadd.f32 %v1340, %v1350
    %v1363 = vadd.f32 %v1341, %v1350
    %v1364 = vadd.f32 %v1342, %v1350
    %v1365 = vadd.f32 %v1343, %v1350
    %v1366 = vadd.f32 %v1344, %v1350
    %v1367 = vadd.f32 %v1345, %v1350
    %v1368 = vmax.f32 %v1352, 0.0
    %v1369 = vmax.f32 %v1353, 0.0
    %v1370 = vmax.f32 %v1354, 0.0
    %v1371 = vmax.f32 %v1355, 0.0
    %v1372 = vmax.f32 %v1356, 0.0
    %v1373 = vmax.f32 %v1357, 0.0
    %v1374 = vmax.f32 %v1358, 0.0
    %v1375 = vmax.f32 %v1359, 0.0
    %v1376 = vmax.f32 %v1360, 0.0
    %v1377 = vmax.f32 %v1361, 0.0
    %v1378 = vmax.f32 %v1362, 0.0
    %v1379 = vmax.f32 %v1363, 0.0
    %v1380 = vmax.f32 %v1364, 0.0
    %v1381 = vmax.f32 %v1365, 0.0
    %v1382 = vmax.f32 %v1366, 0.0
    %v1383 = vmax.f32 %v1367, 0.0
    %1384 = vst.msk [vmem:[#allocation2] sm:$0xff] %vm901, 0.0
    %vm1385 = vcmask 58368
    %1386 = vst.msk [vmem:[#allocation2 + $0x8] sm:$0x3] %vm1385, 0.0
    %1387 = vst.msk [vmem:[#allocation2 + $0x10] sm:$0xff] %vm901, 0.0
    %1388 = vst.msk [vmem:[#allocation2 + $0x18] sm:$0x3] %vm1385, 0.0
    %1389 = vst.msk [vmem:[#allocation2 + $0x20] sm:$0xff] %vm901, 0.0
    %1390 = vst.msk [vmem:[#allocation2 + $0x28] sm:$0x3] %vm1385, 0.0
    %1391 = vst.msk [vmem:[#allocation2 + $0x30] sm:$0xff] %vm901, 0.0
    %1392 = vst.msk [vmem:[#allocation2 + $0x38] sm:$0x3] %vm1385, 0.0
    %1393 = vst.msk [vmem:[#allocation2 + $0x40] sm:$0xff] %vm901, 0.0
    %1394 = vst.msk [vmem:[#allocation2 + $0x48] sm:$0x3] %vm1385, 0.0
    %1395 = vst.msk [vmem:[#allocation2 + $0x50] sm:$0xff] %vm901, 0.0
    %1396 = vst.msk [vmem:[#allocation2 + $0x58] sm:$0x3] %vm1385, 0.0
    %1397 = vst.msk [vmem:[#allocation2 + $0x60] sm:$0xff] %vm901, 0.0
    %1398 = vst.msk [vmem:[#allocation2 + $0x68] sm:$0x3] %vm1385, 0.0
    %1399 = vst.msk [vmem:[#allocation2 + $0x70] sm:$0xff] %vm901, 0.0
    %1400 = vst.msk [vmem:[#allocation2 + $0x78] sm:$0x3] %vm1385, 0.0
    %1401 = vst.msk [vmem:[#allocation2 + $0x80] sm:$0xff] %vm901, 0.0
    %1402 = vst.msk [vmem:[#allocation2 + $0x88] sm:$0x3] %vm1385, 0.0
    %1403 = vst.msk [vmem:[#allocation2 + $0x90] sm:$0xff] %vm901, 0.0
    %1404 = vst.msk [vmem:[#allocation2 + $0x98] sm:$0x3] %vm1385, 0.0
    %1405 = vst.msk [vmem:[#allocation2 + $0xa0] sm:$0xff] %vm901, 0.0
    %1406 = vst.msk [vmem:[#allocation2 + $0xa8] sm:$0x3] %vm1385, 0.0
    %1407 = vst.msk [vmem:[#allocation2 + $0xb0] sm:$0xff] %vm901, 0.0
    %1408 = vst.msk [vmem:[#allocation2 + $0xb8] sm:$0x3] %vm1385, 0.0
    %1409 = vst.msk [vmem:[#allocation2 + $0xc0] sm:$0xff] %vm901, 0.0
    %1410 = vst.msk [vmem:[#allocation2 + $0xc8] sm:$0x3] %vm1385, 0.0
    %1411 = vst.msk [vmem:[#allocation2 + $0xd0] sm:$0xff] %vm901, 0.0
    %1412 = vst.msk [vmem:[#allocation2 + $0xd8] sm:$0x3] %vm1385, 0.0
    %1413 = vst.msk [vmem:[#allocation2 + $0xe0] sm:$0xff] %vm901, 0.0
    %1414 = vst.msk [vmem:[#allocation2 + $0xe8] sm:$0x3] %vm1385, 0.0
    %1415 = vst.msk [vmem:[#allocation2 + $0xf0] sm:$0xff] %vm901, 0.0
    %1416 = vst.msk [vmem:[#allocation2 + $0xf8] sm:$0x3] %vm1385, 0.0
    %1417 = vst.msk [vmem:[#allocation2 + $0x100] sm:$0xff] %vm901, 0.0
    %1418 = vst.msk [vmem:[#allocation2 + $0x108] sm:$0x3] %vm1385, 0.0
    %1419 = vst.msk [vmem:[#allocation2 + $0x110] sm:$0xff] %vm901, 0.0
    %1420 = vst.msk [vmem:[#allocation2 + $0x118] sm:$0x3] %vm1385, 0.0
    %1421 = vst.msk [vmem:[#allocation2 + $0x120] sm:$0xff] %vm901, 0.0
    %1422 = vst.msk [vmem:[#allocation2 + $0x128] sm:$0x3] %vm1385, 0.0
    %1423 = vst.msk [vmem:[#allocation2 + $0x130] sm:$0xff] %vm901, 0.0
    %1424 = vst.msk [vmem:[#allocation2 + $0x138] sm:$0x3] %vm1385, 0.0
    %s1425 = scalar_lea.vmem [#allocation2], 16
    %1426 = vst.msk [vmem:[%s1425 + $0x1] sm:$0xff] %vm901, %v1368
    %1427 = vst.msk [vmem:[%s1425 + $0x11] sm:$0xff] %vm901, %v1369
    %1428 = vst.msk [vmem:[%s1425 + $0x21] sm:$0xff] %vm901, %v1370
    %1429 = vst.msk [vmem:[%s1425 + $0x31] sm:$0xff] %vm901, %v1371
    %1430 = vst.msk [vmem:[%s1425 + $0x41] sm:$0xff] %vm901, %v1372
    %1431 = vst.msk [vmem:[%s1425 + $0x51] sm:$0xff] %vm901, %v1373
    %1432 = vst.msk [vmem:[%s1425 + $0x61] sm:$0xff] %vm901, %v1374
    %1433 = vst.msk [vmem:[%s1425 + $0x71] sm:$0xff] %vm901, %v1375
    %1434 = vst.msk [vmem:[%s1425 + $0xa1] sm:$0xff] %vm901, %v1376
    %1435 = vst.msk [vmem:[%s1425 + $0xb1] sm:$0xff] %vm901, %v1377
    %1436 = vst.msk [vmem:[%s1425 + $0xc1] sm:$0xff] %vm901, %v1378
    %1437 = vst.msk [vmem:[%s1425 + $0xd1] sm:$0xff] %vm901, %v1379
    %1438 = vst.msk [vmem:[%s1425 + $0xe1] sm:$0xff] %vm901, %v1380
    %1439 = vst.msk [vmem:[%s1425 + $0xf1] sm:$0xff] %vm901, %v1381
    %1440 = vst.msk [vmem:[%s1425 + $0x101] sm:$0xff] %vm901, %v1382
    %1441 = vst.msk [vmem:[%s1425 + $0x111] sm:$0xff] %vm901, %v1383
    %v1442 = vld [vmem:[#allocation2] sm:$0xff]
    %v1443 = vld [vmem:[#allocation2 + $0x8] sm:$0x3]
    %v1444 = vld [vmem:[#allocation2 + $0x10] sm:$0xff]
    %v1445 = vld [vmem:[#allocation2 + $0x18] sm:$0x3]
    %v1446 = vld [vmem:[#allocation2 + $0x20] sm:$0xff]
    %v1447 = vld [vmem:[#allocation2 + $0x28] sm:$0x3]
    %v1448 = vld [vmem:[#allocation2 + $0x30] sm:$0xff]
    %v1449 = vld [vmem:[#allocation2 + $0x38] sm:$0x3]
    %v1450 = vld [vmem:[#allocation2 + $0x40] sm:$0xff]
    %v1451 = vld [vmem:[#allocation2 + $0x48] sm:$0x3]
    %v1452 = vld [vmem:[#allocation2 + $0x50] sm:$0xff]
    %v1453 = vld [vmem:[#allocation2 + $0x58] sm:$0x3]
    %v1454 = vld [vmem:[#allocation2 + $0x60] sm:$0xff]
    %v1455 = vld [vmem:[#allocation2 + $0x68] sm:$0x3]
    %v1456 = vld [vmem:[#allocation2 + $0x70] sm:$0xff]
    %v1457 = vld [vmem:[#allocation2 + $0x78] sm:$0x3]
    %v1458 = vld [vmem:[#allocation2 + $0x80] sm:$0xff]
    %v1459 = vld [vmem:[#allocation2 + $0x88] sm:$0x3]
    %v1460 = vld [vmem:[#allocation2 + $0x90] sm:$0xff]
    %v1461 = vld [vmem:[#allocation2 + $0x98] sm:$0x3]
    %v1462 = vld [vmem:[#allocation2 + $0xa0] sm:$0xff]
    %v1463 = vld [vmem:[#allocation2 + $0xa8] sm:$0x3]
    %v1464 = vld [vmem:[#allocation2 + $0xb0] sm:$0xff]
    %v1465 = vld [vmem:[#allocation2 + $0xb8] sm:$0x3]
    %v1466 = vld [vmem:[#allocation2 + $0xc0] sm:$0xff]
    %v1467 = vld [vmem:[#allocation2 + $0xc8] sm:$0x3]
    %v1468 = vld [vmem:[#allocation2 + $0xd0] sm:$0xff]
    %v1469 = vld [vmem:[#allocation2 + $0xd8] sm:$0x3]
    %v1470 = vld [vmem:[#allocation2 + $0xe0] sm:$0xff]
    %v1471 = vld [vmem:[#allocation2 + $0xe8] sm:$0x3]
    %v1472 = vld [vmem:[#allocation2 + $0xf0] sm:$0xff]
    %v1473 = vld [vmem:[#allocation2 + $0xf8] sm:$0x3]
    %v1474 = vld [vmem:[#allocation2 + $0x100] sm:$0xff]
    %v1475 = vld [vmem:[#allocation2 + $0x108] sm:$0x3]
    %v1476 = vld [vmem:[#allocation2 + $0x110] sm:$0xff]
    %v1477 = vld [vmem:[#allocation2 + $0x118] sm:$0x3]
    %v1478 = vld [vmem:[#allocation2 + $0x120] sm:$0xff]
    %v1479 = vld [vmem:[#allocation2 + $0x128] sm:$0x3]
    %v1480 = vld [vmem:[#allocation2 + $0x130] sm:$0xff]
    %v1481 = vld [vmem:[#allocation2 + $0x138] sm:$0x3]
    %v1514 = vrot.slane %v1442, 1
    %v1515 = vrot.slane %v1443, 1
    %v1516 = vsel %vm391, %v1514, %v1515
    %v1517 = vrot.slane %v1444, 1
    %v1518 = vrot.slane %v1445, 1
    %v1519 = vsel %vm391, %v1517, %v1518
    %v1520 = vrot.slane %v1446, 1
    %v1521 = vrot.slane %v1447, 1
    %v1522 = vsel %vm391, %v1520, %v1521
    %v1523 = vrot.slane %v1448, 1
    %v1524 = vrot.slane %v1449, 1
    %v1525 = vsel %vm391, %v1523, %v1524
    %v1526 = vrot.slane %v1450, 1
    %v1527 = vrot.slane %v1451, 1
    %v1528 = vsel %vm391, %v1526, %v1527
    %v1529 = vrot.slane %v1452, 1
    %v1530 = vrot.slane %v1453, 1
    %v1531 = vsel %vm391, %v1529, %v1530
    %v1532 = vrot.slane %v1454, 1
    %v1533 = vrot.slane %v1455, 1
    %v1534 = vsel %vm391, %v1532, %v1533
    %v1535 = vrot.slane %v1456, 1
    %v1536 = vrot.slane %v1457, 1
    %v1537 = vsel %vm391, %v1535, %v1536
    %v1538 = vrot.slane %v1462, 1
    %v1539 = vrot.slane %v1463, 1
    %v1540 = vsel %vm391, %v1538, %v1539
    %v1541 = vrot.slane %v1464, 1
    %v1542 = vrot.slane %v1465, 1
    %v1543 = vsel %vm391, %v1541, %v1542
    %v1544 = vrot.slane %v1466, 1
    %v1545 = vrot.slane %v1467, 1
    %v1546 = vsel %vm391, %v1544, %v1545
    %v1547 = vrot.slane %v1468, 1
    %v1548 = vrot.slane %v1469, 1
    %v1549 = vsel %vm391, %v1547, %v1548
    %v1550 = vrot.slane %v1470, 1
    %v1551 = vrot.slane %v1471, 1
    %v1552 = vsel %vm391, %v1550, %v1551
    %v1553 = vrot.slane %v1472, 1
    %v1554 = vrot.slane %v1473, 1
    %v1555 = vsel %vm391, %v1553, %v1554
    %v1556 = vrot.slane %v1474, 1
    %v1557 = vrot.slane %v1475, 1
    %v1558 = vsel %vm391, %v1556, %v1557
    %v1559 = vrot.slane %v1476, 1
    %v1560 = vrot.slane %v1477, 1
    %v1561 = vsel %vm391, %v1559, %v1560
    %1562 = vrot.lane.b32.xlu0 %v1516, 8
    %v1563 = vpop.permute.xlu0 %1562
    %1564 = vrot.lane.b32.xlu0 %v1519, 8
    %v1565 = vpop.permute.xlu0 %1564
    %1566 = vrot.lane.b32.xlu0 %v1522, 8
    %v1567 = vpop.permute.xlu0 %1566
    %1568 = vrot.lane.b32.xlu0 %v1525, 8
    %v1569 = vpop.permute.xlu0 %1568
    %1570 = vrot.lane.b32.xlu0 %v1528, 8
    %v1571 = vpop.permute.xlu0 %1570
    %1572 = vrot.lane.b32.xlu0 %v1531, 8
    %v1573 = vpop.permute.xlu0 %1572
    %1574 = vrot.lane.b32.xlu0 %v1534, 8
    %v1575 = vpop.permute.xlu0 %1574
    %1576 = vrot.lane.b32.xlu0 %v1537, 8
    %v1577 = vpop.permute.xlu0 %1576
    %1578 = vrot.lane.b32.xlu0 %v1540, 8
    %v1579 = vpop.permute.xlu0 %1578
    %1580 = vrot.lane.b32.xlu0 %v1543, 8
    %v1581 = vpop.permute.xlu0 %1580
    %1582 = vrot.lane.b32.xlu0 %v1546, 8
    %v1583 = vpop.permute.xlu0 %1582
    %1584 = vrot.lane.b32.xlu0 %v1549, 8
    %v1585 = vpop.permute.xlu0 %1584
    %1586 = vrot.lane.b32.xlu0 %v1552, 8
    %v1587 = vpop.permute.xlu0 %1586
    %1588 = vrot.lane.b32.xlu0 %v1555, 8
    %v1589 = vpop.permute.xlu0 %1588
    %1590 = vrot.lane.b32.xlu0 %v1558, 8
    %v1591 = vpop.permute.xlu0 %1590
    %1592 = vrot.lane.b32.xlu0 %v1561, 8
    %v1593 = vpop.permute.xlu0 %1592
    %vm1610 = vcmask 1045504
    %v1611 = vrot.slane %v1442, 2
    %v1612 = vrot.slane %v1443, 2
    %v1613 = vsel %vm1610, %v1611, %v1612
    %v1614 = vrot.slane %v1444, 2
    %v1615 = vrot.slane %v1445, 2
    %v1616 = vsel %vm1610, %v1614, %v1615
    %v1617 = vrot.slane %v1446, 2
    %v1618 = vrot.slane %v1447, 2
    %v1619 = vsel %vm1610, %v1617, %v1618
    %v1620 = vrot.slane %v1448, 2
    %v1621 = vrot.slane %v1449, 2
    %v1622 = vsel %vm1610, %v1620, %v1621
    %v1623 = vrot.slane %v1450, 2
    %v1624 = vrot.slane %v1451, 2
    %v1625 = vsel %vm1610, %v1623, %v1624
    %v1626 = vrot.slane %v1452, 2
    %v1627 = vrot.slane %v1453, 2
    %v1628 = vsel %vm1610, %v1626, %v1627
    %v1629 = vrot.slane %v1454, 2
    %v1630 = vrot.slane %v1455, 2
    %v1631 = vsel %vm1610, %v1629, %v1630
    %v1632 = vrot.slane %v1456, 2
    %v1633 = vrot.slane %v1457, 2
    %v1634 = vsel %vm1610, %v1632, %v1633
    %v1635 = vrot.slane %v1462, 2
    %v1636 = vrot.slane %v1463, 2
    %v1637 = vsel %vm1610, %v1635, %v1636
    %v1638 = vrot.slane %v1464, 2
    %v1639 = vrot.slane %v1465, 2
    %v1640 = vsel %vm1610, %v1638, %v1639
    %v1641 = vrot.slane %v1466, 2
    %v1642 = vrot.slane %v1467, 2
    %v1643 = vsel %vm1610, %v1641, %v1642
    %v1644 = vrot.slane %v1468, 2
    %v1645 = vrot.slane %v1469, 2
    %v1646 = vsel %vm1610, %v1644, %v1645
    %v1647 = vrot.slane %v1470, 2
    %v1648 = vrot.slane %v1471, 2
    %v1649 = vsel %vm1610, %v1647, %v1648
    %v1650 = vrot.slane %v1472, 2
    %v1651 = vrot.slane %v1473, 2
    %v1652 = vsel %vm1610, %v1650, %v1651
    %v1653 = vrot.slane %v1474, 2
    %v1654 = vrot.slane %v1475, 2
    %v1655 = vsel %vm1610, %v1653, %v1654
    %v1656 = vrot.slane %v1476, 2
    %v1657 = vrot.slane %v1477, 2
    %v1658 = vsel %vm1610, %v1656, %v1657
    %1659 = vrot.lane.b32.xlu0 %v1613, 16
    %v1660 = vpop.permute.xlu0 %1659
    %1661 = vrot.lane.b32.xlu0 %v1616, 16
    %v1662 = vpop.permute.xlu0 %1661
    %1663 = vrot.lane.b32.xlu0 %v1619, 16
    %v1664 = vpop.permute.xlu0 %1663
    %1665 = vrot.lane.b32.xlu0 %v1622, 16
    %v1666 = vpop.permute.xlu0 %1665
    %1667 = vrot.lane.b32.xlu0 %v1625, 16
    %v1668 = vpop.permute.xlu0 %1667
    %1669 = vrot.lane.b32.xlu0 %v1628, 16
    %v1670 = vpop.permute.xlu0 %1669
    %1671 = vrot.lane.b32.xlu0 %v1631, 16
    %v1672 = vpop.permute.xlu0 %1671
    %1673 = vrot.lane.b32.xlu0 %v1634, 16
    %v1674 = vpop.permute.xlu0 %1673
    %1675 = vrot.lane.b32.xlu0 %v1637, 16
    %v1676 = vpop.permute.xlu0 %1675
    %1677 = vrot.lane.b32.xlu0 %v1640, 16
    %v1678 = vpop.permute.xlu0 %1677
    %1679 = vrot.lane.b32.xlu0 %v1643, 16
    %v1680 = vpop.permute.xlu0 %1679
    %1681 = vrot.lane.b32.xlu0 %v1646, 16
    %v1682 = vpop.permute.xlu0 %1681
    %1683 = vrot.lane.b32.xlu0 %v1649, 16
    %v1684 = vpop.permute.xlu0 %1683
    %1685 = vrot.lane.b32.xlu0 %v1652, 16
    %v1686 = vpop.permute.xlu0 %1685
    %1687 = vrot.lane.b32.xlu0 %v1655, 16
    %v1688 = vpop.permute.xlu0 %1687
    %1689 = vrot.lane.b32.xlu0 %v1658, 16
    %v1690 = vpop.permute.xlu0 %1689
    %1709 = vrot.lane.b32.xlu0 %v1444, 24
    %v1710 = vpop.permute.xlu0 %1709
    %1711 = vrot.lane.b32.xlu0 %v1446, 24
    %v1712 = vpop.permute.xlu0 %1711
    %1713 = vrot.lane.b32.xlu0 %v1448, 24
    %v1714 = vpop.permute.xlu0 %1713
    %1715 = vrot.lane.b32.xlu0 %v1450, 24
    %v1716 = vpop.permute.xlu0 %1715
    %1717 = vrot.lane.b32.xlu0 %v1452, 24
    %v1718 = vpop.permute.xlu0 %1717
    %1719 = vrot.lane.b32.xlu0 %v1454, 24
    %v1720 = vpop.permute.xlu0 %1719
    %1721 = vrot.lane.b32.xlu0 %v1456, 24
    %v1722 = vpop.permute.xlu0 %1721
    %1723 = vrot.lane.b32.xlu0 %v1458, 24
    %v1724 = vpop.permute.xlu0 %1723
    %1725 = vrot.lane.b32.xlu0 %v1464, 24
    %v1726 = vpop.permute.xlu0 %1725
    %1727 = vrot.lane.b32.xlu0 %v1466, 24
    %v1728 = vpop.permute.xlu0 %1727
    %1729 = vrot.lane.b32.xlu0 %v1468, 24
    %v1730 = vpop.permute.xlu0 %1729
    %1731 = vrot.lane.b32.xlu0 %v1470, 24
    %v1732 = vpop.permute.xlu0 %1731
    %1733 = vrot.lane.b32.xlu0 %v1472, 24
    %v1734 = vpop.permute.xlu0 %1733
    %1735 = vrot.lane.b32.xlu0 %v1474, 24
    %v1736 = vpop.permute.xlu0 %1735
    %1737 = vrot.lane.b32.xlu0 %v1476, 24
    %v1738 = vpop.permute.xlu0 %1737
    %1739 = vrot.lane.b32.xlu0 %v1478, 24
    %v1740 = vpop.permute.xlu0 %1739
    %v1759 = vrot.slane %v1458, 1
    %v1760 = vrot.slane %v1459, 1
    %v1761 = vsel %vm391, %v1759, %v1760
    %v1762 = vrot.slane %v1478, 1
    %v1763 = vrot.slane %v1479, 1
    %v1764 = vsel %vm391, %v1762, %v1763
    %1765 = vrot.lane.b32.xlu0 %v1519, 32
    %v1766 = vpop.permute.xlu0 %1765
    %1767 = vrot.lane.b32.xlu0 %v1522, 32
    %v1768 = vpop.permute.xlu0 %1767
    %1769 = vrot.lane.b32.xlu0 %v1525, 32
    %v1770 = vpop.permute.xlu0 %1769
    %1771 = vrot.lane.b32.xlu0 %v1528, 32
    %v1772 = vpop.permute.xlu0 %1771
    %1773 = vrot.lane.b32.xlu0 %v1531, 32
    %v1774 = vpop.permute.xlu0 %1773
    %1775 = vrot.lane.b32.xlu0 %v1534, 32
    %v1776 = vpop.permute.xlu0 %1775
    %1777 = vrot.lane.b32.xlu0 %v1537, 32
    %v1778 = vpop.permute.xlu0 %1777
    %1779 = vrot.lane.b32.xlu0 %v1761, 32
    %v1780 = vpop.permute.xlu0 %1779
    %1781 = vrot.lane.b32.xlu0 %v1543, 32
    %v1782 = vpop.permute.xlu0 %1781
    %1783 = vrot.lane.b32.xlu0 %v1546, 32
    %v1784 = vpop.permute.xlu0 %1783
    %1785 = vrot.lane.b32.xlu0 %v1549, 32
    %v1786 = vpop.permute.xlu0 %1785
    %1787 = vrot.lane.b32.xlu0 %v1552, 32
    %v1788 = vpop.permute.xlu0 %1787
    %1789 = vrot.lane.b32.xlu0 %v1555, 32
    %v1790 = vpop.permute.xlu0 %1789
    %1791 = vrot.lane.b32.xlu0 %v1558, 32
    %v1792 = vpop.permute.xlu0 %1791
    %1793 = vrot.lane.b32.xlu0 %v1561, 32
    %v1794 = vpop.permute.xlu0 %1793
    %1795 = vrot.lane.b32.xlu0 %v1764, 32
    %v1796 = vpop.permute.xlu0 %1795
    %v1813 = vrot.slane %v1458, 2
    %v1814 = vrot.slane %v1459, 2
    %v1815 = vsel %vm1610, %v1813, %v1814
    %v1816 = vrot.slane %v1478, 2
    %v1817 = vrot.slane %v1479, 2
    %v1818 = vsel %vm1610, %v1816, %v1817
    %1819 = vrot.lane.b32.xlu0 %v1616, 40
    %v1820 = vpop.permute.xlu0 %1819
    %1821 = vrot.lane.b32.xlu0 %v1619, 40
    %v1822 = vpop.permute.xlu0 %1821
    %1823 = vrot.lane.b32.xlu0 %v1622, 40
    %v1824 = vpop.permute.xlu0 %1823
    %1825 = vrot.lane.b32.xlu0 %v1625, 40
    %v1826 = vpop.permute.xlu0 %1825
    %1827 = vrot.lane.b32.xlu0 %v1628, 40
    %v1828 = vpop.permute.xlu0 %1827
    %1829 = vrot.lane.b32.xlu0 %v1631, 40
    %v1830 = vpop.permute.xlu0 %1829
    %1831 = vrot.lane.b32.xlu0 %v1634, 40
    %v1832 = vpop.permute.xlu0 %1831
    %1833 = vrot.lane.b32.xlu0 %v1815, 40
    %v1834 = vpop.permute.xlu0 %1833
    %1835 = vrot.lane.b32.xlu0 %v1640, 40
    %v1836 = vpop.permute.xlu0 %1835
    %1837 = vrot.lane.b32.xlu0 %v1643, 40
    %v1838 = vpop.permute.xlu0 %1837
    %1839 = vrot.lane.b32.xlu0 %v1646, 40
    %v1840 = vpop.permute.xlu0 %1839
    %1841 = vrot.lane.b32.xlu0 %v1649, 40
    %v1842 = vpop.permute.xlu0 %1841
    %1843 = vrot.lane.b32.xlu0 %v1652, 40
    %v1844 = vpop.permute.xlu0 %1843
    %1845 = vrot.lane.b32.xlu0 %v1655, 40
    %v1846 = vpop.permute.xlu0 %1845
    %1847 = vrot.lane.b32.xlu0 %v1658, 40
    %v1848 = vpop.permute.xlu0 %1847
    %1849 = vrot.lane.b32.xlu0 %v1818, 40
    %v1850 = vpop.permute.xlu0 %1849
    %1869 = vrot.lane.b32.xlu0 %v1446, 48
    %v1870 = vpop.permute.xlu0 %1869
    %1871 = vrot.lane.b32.xlu0 %v1448, 48
    %v1872 = vpop.permute.xlu0 %1871
    %1873 = vrot.lane.b32.xlu0 %v1450, 48
    %v1874 = vpop.permute.xlu0 %1873
    %1875 = vrot.lane.b32.xlu0 %v1452, 48
    %v1876 = vpop.permute.xlu0 %1875
    %1877 = vrot.lane.b32.xlu0 %v1454, 48
    %v1878 = vpop.permute.xlu0 %1877
    %1879 = vrot.lane.b32.xlu0 %v1456, 48
    %v1880 = vpop.permute.xlu0 %1879
    %1881 = vrot.lane.b32.xlu0 %v1458, 48
    %v1882 = vpop.permute.xlu0 %1881
    %1883 = vrot.lane.b32.xlu0 %v1460, 48
    %v1884 = vpop.permute.xlu0 %1883
    %1885 = vrot.lane.b32.xlu0 %v1466, 48
    %v1886 = vpop.permute.xlu0 %1885
    %1887 = vrot.lane.b32.xlu0 %v1468, 48
    %v1888 = vpop.permute.xlu0 %1887
    %1889 = vrot.lane.b32.xlu0 %v1470, 48
    %v1890 = vpop.permute.xlu0 %1889
    %1891 = vrot.lane.b32.xlu0 %v1472, 48
    %v1892 = vpop.permute.xlu0 %1891
    %1893 = vrot.lane.b32.xlu0 %v1474, 48
    %v1894 = vpop.permute.xlu0 %1893
    %1895 = vrot.lane.b32.xlu0 %v1476, 48
    %v1896 = vpop.permute.xlu0 %1895
    %1897 = vrot.lane.b32.xlu0 %v1478, 48
    %v1898 = vpop.permute.xlu0 %1897
    %1899 = vrot.lane.b32.xlu0 %v1480, 48
    %v1900 = vpop.permute.xlu0 %1899
    %v1919 = vrot.slane %v1460, 1
    %v1920 = vrot.slane %v1461, 1
    %v1921 = vsel %vm391, %v1919, %v1920
    %v1922 = vrot.slane %v1480, 1
    %v1923 = vrot.slane %v1481, 1
    %v1924 = vsel %vm391, %v1922, %v1923
    %1925 = vrot.lane.b32.xlu0 %v1522, 56
    %v1926 = vpop.permute.xlu0 %1925
    %1927 = vrot.lane.b32.xlu0 %v1525, 56
    %v1928 = vpop.permute.xlu0 %1927
    %1929 = vrot.lane.b32.xlu0 %v1528, 56
    %v1930 = vpop.permute.xlu0 %1929
    %1931 = vrot.lane.b32.xlu0 %v1531, 56
    %v1932 = vpop.permute.xlu0 %1931
    %1933 = vrot.lane.b32.xlu0 %v1534, 56
    %v1934 = vpop.permute.xlu0 %1933
    %1935 = vrot.lane.b32.xlu0 %v1537, 56
    %v1936 = vpop.permute.xlu0 %1935
    %1937 = vrot.lane.b32.xlu0 %v1761, 56
    %v1938 = vpop.permute.xlu0 %1937
    %1939 = vrot.lane.b32.xlu0 %v1921, 56
    %v1940 = vpop.permute.xlu0 %1939
    %1941 = vrot.lane.b32.xlu0 %v1546, 56
    %v1942 = vpop.permute.xlu0 %1941
    %1943 = vrot.lane.b32.xlu0 %v1549, 56
    %v1944 = vpop.permute.xlu0 %1943
    %1945 = vrot.lane.b32.xlu0 %v1552, 56
    %v1946 = vpop.permute.xlu0 %1945
    %1947 = vrot.lane.b32.xlu0 %v1555, 56
    %v1948 = vpop.permute.xlu0 %1947
    %1949 = vrot.lane.b32.xlu0 %v1558, 56
    %v1950 = vpop.permute.xlu0 %1949
    %1951 = vrot.lane.b32.xlu0 %v1561, 56
    %v1952 = vpop.permute.xlu0 %1951
    %1953 = vrot.lane.b32.xlu0 %v1764, 56
    %v1954 = vpop.permute.xlu0 %1953
    %1955 = vrot.lane.b32.xlu0 %v1924, 56
    %v1956 = vpop.permute.xlu0 %1955
    %v1973 = vrot.slane %v1460, 2
    %v1974 = vrot.slane %v1461, 2
    %v1975 = vsel %vm1610, %v1973, %v1974
    %v1976 = vrot.slane %v1480, 2
    %v1977 = vrot.slane %v1481, 2
    %v1978 = vsel %vm1610, %v1976, %v1977
    %1979 = vrot.lane.b32.xlu0 %v1619, 64
    %v1980 = vpop.permute.xlu0 %1979
    %1981 = vrot.lane.b32.xlu0 %v1622, 64
    %v1982 = vpop.permute.xlu0 %1981
    %1983 = vrot.lane.b32.xlu0 %v1625, 64
    %v1984 = vpop.permute.xlu0 %1983
    %1985 = vrot.lane.b32.xlu0 %v1628, 64
    %v1986 = vpop.permute.xlu0 %1985
    %1987 = vrot.lane.b32.xlu0 %v1631, 64
    %v1988 = vpop.permute.xlu0 %1987
    %1989 = vrot.lane.b32.xlu0 %v1634, 64
    %v1990 = vpop.permute.xlu0 %1989
    %1991 = vrot.lane.b32.xlu0 %v1815, 64
    %v1992 = vpop.permute.xlu0 %1991
    %1993 = vrot.lane.b32.xlu0 %v1975, 64
    %v1994 = vpop.permute.xlu0 %1993
    %1995 = vrot.lane.b32.xlu0 %v1643, 64
    %v1996 = vpop.permute.xlu0 %1995
    %1997 = vrot.lane.b32.xlu0 %v1646, 64
    %v1998 = vpop.permute.xlu0 %1997
    %1999 = vrot.lane.b32.xlu0 %v1649, 64
    %v2000 = vpop.permute.xlu0 %1999
    %2001 = vrot.lane.b32.xlu0 %v1652, 64
    %v2002 = vpop.permute.xlu0 %2001
    %2003 = vrot.lane.b32.xlu0 %v1655, 64
    %v2004 = vpop.permute.xlu0 %2003
    %2005 = vrot.lane.b32.xlu0 %v1658, 64
    %v2006 = vpop.permute.xlu0 %2005
    %2007 = vrot.lane.b32.xlu0 %v1818, 64
    %v2008 = vpop.permute.xlu0 %2007
    %2009 = vrot.lane.b32.xlu0 %v1978, 64
    %v2010 = vpop.permute.xlu0 %2009
    %v2027 = vsel %vm901, %v1442, %v1563
    %v2028 = vsel %vm901, %v1444, %v1565
    %v2029 = vsel %vm901, %v1446, %v1567
    %v2030 = vsel %vm901, %v1448, %v1569
    %v2031 = vsel %vm901, %v1450, %v1571
    %v2032 = vsel %vm901, %v1452, %v1573
    %v2033 = vsel %vm901, %v1454, %v1575
    %v2034 = vsel %vm901, %v1456, %v1577
    %v2035 = vsel %vm901, %v1462, %v1579
    %v2036 = vsel %vm901, %v1464, %v1581
    %v2037 = vsel %vm901, %v1466, %v1583
    %v2038 = vsel %vm901, %v1468, %v1585
    %v2039 = vsel %vm901, %v1470, %v1587
    %v2040 = vsel %vm901, %v1472, %v1589
    %v2041 = vsel %vm901, %v1474, %v1591
    %v2042 = vsel %vm901, %v1476, %v1593
    %v2043 = vsel %vm935, %v2027, %v1660
    %v2044 = vsel %vm935, %v2028, %v1662
    %v2045 = vsel %vm935, %v2029, %v1664
    %v2046 = vsel %vm935, %v2030, %v1666
    %v2047 = vsel %vm935, %v2031, %v1668
    %v2048 = vsel %vm935, %v2032, %v1670
    %v2049 = vsel %vm935, %v2033, %v1672
    %v2050 = vsel %vm935, %v2034, %v1674
    %v2051 = vsel %vm935, %v2035, %v1676
    %v2052 = vsel %vm935, %v2036, %v1678
    %v2053 = vsel %vm935, %v2037, %v1680
    %v2054 = vsel %vm935, %v2038, %v1682
    %v2055 = vsel %vm935, %v2039, %v1684
    %v2056 = vsel %vm935, %v2040, %v1686
    %v2057 = vsel %vm935, %v2041, %v1688
    %v2058 = vsel %vm935, %v2042, %v1690
    %v2059 = vsel %vm969, %v2043, %v1710
    %v2060 = vsel %vm969, %v2044, %v1712
    %v2061 = vsel %vm969, %v2045, %v1714
    %v2062 = vsel %vm969, %v2046, %v1716
    %v2063 = vsel %vm969, %v2047, %v1718
    %v2064 = vsel %vm969, %v2048, %v1720
    %v2065 = vsel %vm969, %v2049, %v1722
    %v2066 = vsel %vm969, %v2050, %v1724
    %v2067 = vsel %vm969, %v2051, %v1726
    %v2068 = vsel %vm969, %v2052, %v1728
    %v2069 = vsel %vm969, %v2053, %v1730
    %v2070 = vsel %vm969, %v2054, %v1732
    %v2071 = vsel %vm969, %v2055, %v1734
    %v2072 = vsel %vm969, %v2056, %v1736
    %v2073 = vsel %vm969, %v2057, %v1738
    %v2074 = vsel %vm969, %v2058, %v1740
    %v2075 = vsel %vm1003, %v2059, %v1766
    %v2076 = vsel %vm1003, %v2060, %v1768
    %v2077 = vsel %vm1003, %v2061, %v1770
    %v2078 = vsel %vm1003, %v2062, %v1772
    %v2079 = vsel %vm1003, %v2063, %v1774
    %v2080 = vsel %vm1003, %v2064, %v1776
    %v2081 = vsel %vm1003, %v2065, %v1778
    %v2082 = vsel %vm1003, %v2066, %v1780
    %v2083 = vsel %vm1003, %v2067, %v1782
    %v2084 = vsel %vm1003, %v2068, %v1784
    %v2085 = vsel %vm1003, %v2069, %v1786
    %v2086 = vsel %vm1003, %v2070, %v1788
    %v2087 = vsel %vm1003, %v2071, %v1790
    %v2088 = vsel %vm1003, %v2072, %v1792
    %v2089 = vsel %vm1003, %v2073, %v1794
    %v2090 = vsel %vm1003, %v2074, %v1796
    %vm2091 = vcmask 326656
    %v2092 = vsel %vm2091, %v2075, %v1820
    %v2093 = vsel %vm2091, %v2076, %v1822
    %v2094 = vsel %vm2091, %v2077, %v1824
    %v2095 = vsel %vm2091, %v2078, %v1826
    %v2096 = vsel %vm2091, %v2079, %v1828
    %v2097 = vsel %vm2091, %v2080, %v1830
    %v2098 = vsel %vm2091, %v2081, %v1832
    %v2099 = vsel %vm2091, %v2082, %v1834
    %v2100 = vsel %vm2091, %v2083, %v1836
    %v2101 = vsel %vm2091, %v2084, %v1838
    %v2102 = vsel %vm2091, %v2085, %v1840
    %v2103 = vsel %vm2091, %v2086, %v1842
    %v2104 = vsel %vm2091, %v2087, %v1844
    %v2105 = vsel %vm2091, %v2088, %v1846
    %v2106 = vsel %vm2091, %v2089, %v1848
    %v2107 = vsel %vm2091, %v2090, %v1850
    %vm2108 = vcmask 392192
    %v2109 = vsel %vm2108, %v2092, %v1870
    %v2110 = vsel %vm2108, %v2093, %v1872
    %v2111 = vsel %vm2108, %v2094, %v1874
    %v2112 = vsel %vm2108, %v2095, %v1876
    %v2113 = vsel %vm2108, %v2096, %v1878
    %v2114 = vsel %vm2108, %v2097, %v1880
    %v2115 = vsel %vm2108, %v2098, %v1882
    %v2116 = vsel %vm2108, %v2099, %v1884
    %v2117 = vsel %vm2108, %v2100, %v1886
    %v2118 = vsel %vm2108, %v2101, %v1888
    %v2119 = vsel %vm2108, %v2102, %v1890
    %v2120 = vsel %vm2108, %v2103, %v1892
    %v2121 = vsel %vm2108, %v2104, %v1894
    %v2122 = vsel %vm2108, %v2105, %v1896
    %v2123 = vsel %vm2108, %v2106, %v1898
    %v2124 = vsel %vm2108, %v2107, %v1900
    %vm2125 = vcmask 457728
    %v2126 = vsel %vm2125, %v2109, %v1926
    %v2127 = vsel %vm2125, %v2110, %v1928
    %v2128 = vsel %vm2125, %v2111, %v1930
    %v2129 = vsel %vm2125, %v2112, %v1932
    %v2130 = vsel %vm2125, %v2113, %v1934
    %v2131 = vsel %vm2125, %v2114, %v1936
    %v2132 = vsel %vm2125, %v2115, %v1938
    %v2133 = vsel %vm2125, %v2116, %v1940
    %v2134 = vsel %vm2125, %v2117, %v1942
    %v2135 = vsel %vm2125, %v2118, %v1944
    %v2136 = vsel %vm2125, %v2119, %v1946
    %v2137 = vsel %vm2125, %v2120, %v1948
    %v2138 = vsel %vm2125, %v2121, %v1950
    %v2139 = vsel %vm2125, %v2122, %v1952
    %v2140 = vsel %vm2125, %v2123, %v1954
    %v2141 = vsel %vm2125, %v2124, %v1956
    %vm2142 = vcmask 523264
    %v2143 = vsel %vm2142, %v2126, %v1980
    %v2144 = vsel %vm2142, %v2127, %v1982
    %v2145 = vsel %vm2142, %v2128, %v1984
    %v2146 = vsel %vm2142, %v2129, %v1986
    %v2147 = vsel %vm2142, %v2130, %v1988
    %v2148 = vsel %vm2142, %v2131, %v1990
    %v2149 = vsel %vm2142, %v2132, %v1992
    %v2150 = vsel %vm2142, %v2133, %v1994
    %v2151 = vsel %vm2142, %v2134, %v1996
    %v2152 = vsel %vm2142, %v2135, %v1998
    %v2153 = vsel %vm2142, %v2136, %v2000
    %v2154 = vsel %vm2142, %v2137, %v2002
    %v2155 = vsel %vm2142, %v2138, %v2004
    %v2156 = vsel %vm2142, %v2139, %v2006
    %v2157 = vsel %vm2142, %v2140, %v2008
    %v2158 = vsel %vm2142, %v2141, %v2010
    %v2159 = vld [vmem:[#allocation15] sm:$0xff]
    %v2160 = vld [vmem:[#allocation15 + $0x8] sm:$0xff]
    %v2161 = vld [vmem:[#allocation15 + $0x10] sm:$0xff]
    %v2162 = vld [vmem:[#allocation15 + $0x18] sm:$0xff]
    %v2163 = vld [vmem:[#allocation15 + $0x20] sm:$0xff]
    %v2164 = vld [vmem:[#allocation15 + $0x28] sm:$0xff]
    %v2165 = vld [vmem:[#allocation15 + $0x30] sm:$0xff]
    %v2166 = vld [vmem:[#allocation15 + $0x38] sm:$0xff]
    %v2167 = vld [vmem:[#allocation15 + $0x40] sm:$0xff]
    %vm2168 = vcmask 588800
    %v2170 = vsel %vm2168, %v2143, 0
    %v2173 = vsel %vm2168, %v2144, 0
    %v2176 = vsel %vm2168, %v2145, 0
    %v2179 = vsel %vm2168, %v2146, 0
    %v2182 = vsel %vm2168, %v2147, 0
    %v2185 = vsel %vm2168, %v2148, 0
    %v2188 = vsel %vm2168, %v2149, 0
    %v2191 = vsel %vm2168, %v2150, 0
    %v2194 = vsel %vm2168, %v2151, 0
    %v2197 = vsel %vm2168, %v2152, 0
    %v2200 = vsel %vm2168, %v2153, 0
    %v2203 = vsel %vm2168, %v2154, 0
    %v2206 = vsel %vm2168, %v2155, 0
    %v2209 = vsel %vm2168, %v2156, 0
    %v2212 = vsel %vm2168, %v2157, 0
    %v2215 = vsel %vm2168, %v2158, 0
    %2217 = vmatprep.subr.mxu0 0.0
    %2218 = vmatpush1.msra.mxu0 %v2159
    %2219 = vmatprep.subr.mxu0 0.0
    %2220 = vmatpush1.msra.mxu0 %v2160
    %2221 = vmatprep.subr.mxu0 0.0
    %2222 = vmatpush1.msra.mxu0 %v2161
    %2223 = vmatprep.subr.mxu0 0.0
    %2224 = vmatpush1.msra.mxu0 %v2162
    %2225 = vmatprep.subr.mxu0 0.0
    %2226 = vmatpush1.msra.mxu0 %v2163
    %2227 = vmatprep.subr.mxu0 0.0
    %2228 = vmatpush1.msra.mxu0 %v2164
    %2229 = vmatprep.subr.mxu0 0.0
    %2230 = vmatpush1.msra.mxu0 %v2165
    %2231 = vmatprep.subr.mxu0 0.0
    %2232 = vmatpush1.msra.mxu0 %v2166
    %2233 = vmatprep.subr.mxu0 0.0
    %2234 = vmatpush1.msra.mxu0 %v2167
    %2235 = vmatprep.subr.mxu0 0.0
    %2236 = vmatpush1.msra.mxu0 0.0
    %2237 = vmatprep.subr.mxu0 0.0
    %2238 = vmatpush1.msra.mxu0 0.0
    %2239 = vmatprep.subr.mxu0 0.0
    %2240 = vmatpush1.msra.mxu0 0.0
    %2241 = vmatprep.subr.mxu0 0.0
    %2242 = vmatpush1.msra.mxu0 0.0
    %2243 = vmatprep.subr.mxu0 0.0
    %2244 = vmatpush1.msra.mxu0 0.0
    %2245 = vmatprep.subr.mxu0 0.0
    %2246 = vmatpush1.msra.mxu0 0.0
    %2247 = vmatprep.subr.mxu0 0.0
    %2248 = vmatpush1.msra.mxu0 0.0
    %2249 = vmatprep.subr.mxu0 0.0
    %2250 = vmatpush1.msra.mxu0 0.0
    %2251 = vmatprep.subr.mxu0 0.0
    %2252 = vmatpush1.msra.mxu0 0.0
    %2253 = vmatprep.subr.mxu0 0.0
    %2254 = vmatpush1.msra.mxu0 0.0
    %2255 = vmatprep.subr.mxu0 0.0
    %2256 = vmatpush1.msra.mxu0 0.0
    %2257 = vmatprep.subr.mxu0 0.0
    %2258 = vmatpush1.msra.mxu0 0.0
    %2259 = vmatprep.subr.mxu0 0.0
    %2260 = vmatpush1.msra.mxu0 0.0
    %2261 = vmatprep.subr.mxu0 0.0
    %2262 = vmatpush1.msra.mxu0 0.0
    %2263 = vmatprep.subr.mxu0 0.0
    %2264 = vmatpush1.msra.mxu0 0.0
    %2265 = vmatprep.subr.mxu0 0.0
    %2266 = vmatpush1.msra.mxu0 0.0
    %2267 = vmatprep.subr.mxu0 0.0
    %2268 = vmatpush1.msra.mxu0 0.0
    %2269 = vmatprep.subr.mxu0 0.0
    %2270 = vmatpush1.msra.mxu0 0.0
    %2271 = vmatprep.subr.mxu0 0.0
    %2272 = vmatpush1.msra.mxu0 0.0
    %2273 = vmatprep.subr.mxu0 0.0
    %2274 = vmatpush1.msra.mxu0 0.0
    %2275 = vmatprep.subr.mxu0 0.0
    %2276 = vmatpush1.msra.mxu0 0.0
    %2277 = vmatprep.subr.mxu0 0.0
    %2278 = vmatpush1.msra.mxu0 0.0
    %2279 = vmatprep.subr.mxu0 0.0
    %2280 = vmatpush1.msra.mxu0 0.0
    %2281 = vmatprep.mubr.f32.mxu0 0.0
    %2282 = vmatmul.mubr.f32.gmra.mrb[0].mxu0 %v2170
    %v2283 = vpop.f32.mrb[0].mxu0
    %v2284 = vadd.f32 0.0, %v2283
    %v2285 = vpop.f32.mrb[0].mxu0
    %2286 = vmatprep.mubr.f32.mxu0 0.0
    %2287 = vmatmul.mubr.f32.gmra.mrb[0].mxu0 %v2173
    %v2288 = vpop.f32.mrb[0].mxu0
    %v2289 = vadd.f32 0.0, %v2288
    %v2290 = vpop.f32.mrb[0].mxu0
    %2291 = vmatprep.mubr.f32.mxu0 0.0
    %2292 = vmatmul.mubr.f32.gmra.mrb[0].mxu0 %v2176
    %v2293 = vpop.f32.mrb[0].mxu0
    %v2294 = vadd.f32 0.0, %v2293
    %v2295 = vpop.f32.mrb[0].mxu0
    %2296 = vmatprep.mubr.f32.mxu0 0.0
    %2297 = vmatmul.mubr.f32.gmra.mrb[0].mxu0 %v2179
    %v2298 = vpop.f32.mrb[0].mxu0
    %v2299 = vadd.f32 0.0, %v2298
    %v2300 = vpop.f32.mrb[0].mxu0
    %2301 = vmatprep.mubr.f32.mxu0 0.0
    %2302 = vmatmul.mubr.f32.gmra.mrb[0].mxu0 %v2182
    %v2303 = vpop.f32.mrb[0].mxu0
    %v2304 = vadd.f32 0.0, %v2303
    %v2305 = vpop.f32.mrb[0].mxu0
    %2306 = vmatprep.mubr.f32.mxu0 0.0
    %2307 = vmatmul.mubr.f32.gmra.mrb[0].mxu0 %v2185
    %v2308 = vpop.f32.mrb[0].mxu0
    %v2309 = vadd.f32 0.0, %v2308
    %v2310 = vpop.f32.mrb[0].mxu0
    %2311 = vmatprep.mubr.f32.mxu0 0.0
    %2312 = vmatmul.mubr.f32.gmra.mrb[0].mxu0 %v2188
    %v2313 = vpop.f32.mrb[0].mxu0
    %v2314 = vadd.f32 0.0, %v2313
    %v2315 = vpop.f32.mrb[0].mxu0
    %2316 = vmatprep.mubr.f32.mxu0 0.0
    %2317 = vmatmul.mubr.f32.gmra.mrb[0].mxu0 %v2191
    %v2318 = vpop.f32.mrb[0].mxu0
    %v2319 = vadd.f32 0.0, %v2318
    %v2320 = vpop.f32.mrb[0].mxu0
    %2321 = vmatprep.mubr.f32.mxu0 0.0
    %2322 = vmatmul.mubr.f32.gmra.mrb[0].mxu0 %v2194
    %v2323 = vpop.f32.mrb[0].mxu0
    %v2324 = vadd.f32 0.0, %v2323
    %v2325 = vpop.f32.mrb[0].mxu0
    %2326 = vmatprep.mubr.f32.mxu0 0.0
    %2327 = vmatmul.mubr.f32.gmra.mrb[0].mxu0 %v2197
    %v2328 = vpop.f32.mrb[0].mxu0
    %v2329 = vadd.f32 0.0, %v2328
    %v2330 = vpop.f32.mrb[0].mxu0
    %2331 = vmatprep.mubr.f32.mxu0 0.0
    %2332 = vmatmul.mubr.f32.gmra.mrb[0].mxu0 %v2200
    %v2333 = vpop.f32.mrb[0].mxu0
    %v2334 = vadd.f32 0.0, %v2333
    %v2335 = vpop.f32.mrb[0].mxu0
    %2336 = vmatprep.mubr.f32.mxu0 0.0
    %2337 = vmatmul.mubr.f32.gmra.mrb[0].mxu0 %v2203
    %v2338 = vpop.f32.mrb[0].mxu0
    %v2339 = vadd.f32 0.0, %v2338
    %v2340 = vpop.f32.mrb[0].mxu0
    %2341 = vmatprep.mubr.f32.mxu0 0.0
    %2342 = vmatmul.mubr.f32.gmra.mrb[0].mxu0 %v2206
    %v2343 = vpop.f32.mrb[0].mxu0
    %v2344 = vadd.f32 0.0, %v2343
    %v2345 = vpop.f32.mrb[0].mxu0
    %2346 = vmatprep.mubr.f32.mxu0 0.0
    %2347 = vmatmul.mubr.f32.gmra.mrb[0].mxu0 %v2209
    %v2348 = vpop.f32.mrb[0].mxu0
    %v2349 = vadd.f32 0.0, %v2348
    %v2350 = vpop.f32.mrb[0].mxu0
    %2351 = vmatprep.mubr.f32.mxu0 0.0
    %2352 = vmatmul.mubr.f32.gmra.mrb[0].mxu0 %v2212
    %v2353 = vpop.f32.mrb[0].mxu0
    %v2354 = vadd.f32 0.0, %v2353
    %v2355 = vpop.f32.mrb[0].mxu0
    %2356 = vmatprep.mubr.f32.mxu0 0.0
    %2357 = vmatmul.mubr.f32.gmra.mrb[0].mxu0 %v2215
    %v2358 = vpop.f32.mrb[0].mxu0
    %v2359 = vadd.f32 0.0, %v2358
    %v2360 = vpop.f32.mrb[0].mxu0
    %2361 = vdwg.mxu0
    %v2362 = vld [vmem:[#allocation17] sm:$0x1]
    %v2363 = vld [vmem:[#allocation18] sm:$0x1]
    %v2364 = vsel %vm901, %v2284, 0.0
    %v2365 = vsel %vm901, %v2289, 0.0
    %v2366 = vadd.f32 %v2364, %v2365
    %v2367 = vsel %vm901, %v2294, 0.0
    %v2368 = vadd.f32 %v2366, %v2367
    %v2369 = vsel %vm901, %v2299, 0.0
    %v2370 = vadd.f32 %v2368, %v2369
    %v2371 = vsel %vm901, %v2304, 0.0
    %v2372 = vadd.f32 %v2370, %v2371
    %v2373 = vsel %vm901, %v2309, 0.0
    %v2374 = vadd.f32 %v2372, %v2373
    %v2375 = vsel %vm901, %v2314, 0.0
    %v2376 = vadd.f32 %v2374, %v2375
    %v2377 = vsel %vm901, %v2319, 0.0
    %v2378 = vadd.f32 %v2376, %v2377
    %v2379 = vsel %vm901, %v2324, 0.0
    %v2380 = vadd.f32 %v2378, %v2379
    %v2381 = vsel %vm901, %v2329, 0.0
    %v2382 = vadd.f32 %v2380, %v2381
    %v2383 = vsel %vm901, %v2334, 0.0
    %v2384 = vadd.f32 %v2382, %v2383
    %v2385 = vsel %vm901, %v2339, 0.0
    %v2386 = vadd.f32 %v2384, %v2385
    %v2387 = vsel %vm901, %v2344, 0.0
    %v2388 = vadd.f32 %v2386, %v2387
    %v2389 = vsel %vm901, %v2349, 0.0
    %v2390 = vadd.f32 %v2388, %v2389
    %v2391 = vsel %vm901, %v2354, 0.0
    %v2392 = vadd.f32 %v2390, %v2391
    %v2393 = vsel %vm901, %v2359, 0.0
    %v2394 = vadd.f32 %v2392, %v2393
    %v2395 = vrot.slane %v2394, 4
    %v2396 = vadd.f32 %v2394, %v2395
    %v2397 = vrot.slane %v2396, 2
    %v2398 = vadd.f32 %v2396, %v2397
    %v2399 = vrot.slane %v2398, 1
    %v2400 = vadd.f32 %v2398, %v2399
    %v2401 = vmul.f32 %v2400, 0.0078125
    %v2402 = vmul.f32 %v2284, %v2284
    %v2403 = vmul.f32 %v2289, %v2289
    %v2404 = vmul.f32 %v2294, %v2294
    %v2405 = vmul.f32 %v2299, %v2299
    %v2406 = vmul.f32 %v2304, %v2304
    %v2407 = vmul.f32 %v2309, %v2309
    %v2408 = vmul.f32 %v2314, %v2314
    %v2409 = vmul.f32 %v2319, %v2319
    %v2410 = vmul.f32 %v2324, %v2324
    %v2411 = vmul.f32 %v2329, %v2329
    %v2412 = vmul.f32 %v2334, %v2334
    %v2413 = vmul.f32 %v2339, %v2339
    %v2414 = vmul.f32 %v2344, %v2344
    %v2415 = vmul.f32 %v2349, %v2349
    %v2416 = vmul.f32 %v2354, %v2354
    %v2417 = vmul.f32 %v2359, %v2359
    %v2418 = vsel %vm901, %v2402, 0.0
    %v2419 = vsel %vm901, %v2403, 0.0
    %v2420 = vadd.f32 %v2418, %v2419
    %v2421 = vsel %vm901, %v2404, 0.0
    %v2422 = vadd.f32 %v2420, %v2421
    %v2423 = vsel %vm901, %v2405, 0.0
    %v2424 = vadd.f32 %v2422, %v2423
    %v2425 = vsel %vm901, %v2406, 0.0
    %v2426 = vadd.f32 %v2424, %v2425
    %v2427 = vsel %vm901, %v2407, 0.0
    %v2428 = vadd.f32 %v2426, %v2427
    %v2429 = vsel %vm901, %v2408, 0.0
    %v2430 = vadd.f32 %v2428, %v2429
    %v2431 = vsel %vm901, %v2409, 0.0
    %v2432 = vadd.f32 %v2430, %v2431
    %v2433 = vsel %vm901, %v2410, 0.0
    %v2434 = vadd.f32 %v2432, %v2433
    %v2435 = vsel %vm901, %v2411, 0.0
    %v2436 = vadd.f32 %v2434, %v2435
    %v2437 = vsel %vm901, %v2412, 0.0
    %v2438 = vadd.f32 %v2436, %v2437
    %v2439 = vsel %vm901, %v2413, 0.0
    %v2440 = vadd.f32 %v2438, %v2439
    %v2441 = vsel %vm901, %v2414, 0.0
    %v2442 = vadd.f32 %v2440, %v2441
    %v2443 = vsel %vm901, %v2415, 0.0
    %v2444 = vadd.f32 %v2442, %v2443
    %v2445 = vsel %vm901, %v2416, 0.0
    %v2446 = vadd.f32 %v2444, %v2445
    %v2447 = vsel %vm901, %v2417, 0.0
    %v2448 = vadd.f32 %v2446, %v2447
    %v2449 = vrot.slane %v2448, 4
    %v2450 = vadd.f32 %v2448, %v2449
    %v2451 = vrot.slane %v2450, 2
    %v2452 = vadd.f32 %v2450, %v2451
    %v2453 = vrot.slane %v2452, 1
    %v2454 = vadd.f32 %v2452, %v2453
    %v2455 = vmul.f32 %v2454, 0.0078125
    %v2456 = vmul.f32 %v2401, %v2401
    %v2457 = vsub.f32 %v2455, %v2456
    %v2458 = vadd.f32 %v2457, 1e-05
    %v2459 = vrsqrt.pop %v2458
    %v2460 = vmul.f32 %v2362, %v2459
    %v2461 = vmul.f32 %v2401, %v2460
    %v2462 = vsub.f32 %v2363, %v2461
    %v2464 = vlaneseq
    %v2465 = vshrl.u32 %v2464, 7
    %v2466 = vsub.s32 0, %v2465
    %v2467 = vrot.slane %v2460, %v2466
    %v2469 = vmul.f32 %v2284, %v2467
    %v2470 = vmul.f32 %v2289, %v2467
    %v2471 = vmul.f32 %v2294, %v2467
    %v2472 = vmul.f32 %v2299, %v2467
    %v2473 = vmul.f32 %v2304, %v2467
    %v2474 = vmul.f32 %v2309, %v2467
    %v2475 = vmul.f32 %v2314, %v2467
    %v2476 = vmul.f32 %v2319, %v2467
    %v2477 = vmul.f32 %v2324, %v2467
    %v2478 = vmul.f32 %v2329, %v2467
    %v2479 = vmul.f32 %v2334, %v2467
    %v2480 = vmul.f32 %v2339, %v2467
    %v2481 = vmul.f32 %v2344, %v2467
    %v2482 = vmul.f32 %v2349, %v2467
    %v2483 = vmul.f32 %v2354, %v2467
    %v2484 = vmul.f32 %v2359, %v2467
    %v2486 = vlaneseq
    %v2487 = vshrl.u32 %v2486, 7
    %v2488 = vsub.s32 0, %v2487
    %v2489 = vrot.slane %v2462, %v2488
    %v2491 = vadd.f32 %v2469, %v2489
    %v2492 = vadd.f32 %v2470, %v2489
    %v2493 = vadd.f32 %v2471, %v2489
    %v2494 = vadd.f32 %v2472, %v2489
    %v2495 = vadd.f32 %v2473, %v2489
    %v2496 = vadd.f32 %v2474, %v2489
    %v2497 = vadd.f32 %v2475, %v2489
    %v2498 = vadd.f32 %v2476, %v2489
    %v2499 = vadd.f32 %v2477, %v2489
    %v2500 = vadd.f32 %v2478, %v2489
    %v2501 = vadd.f32 %v2479, %v2489
    %v2502 = vadd.f32 %v2480, %v2489
    %v2503 = vadd.f32 %v2481, %v2489
    %v2504 = vadd.f32 %v2482, %v2489
    %v2505 = vadd.f32 %v2483, %v2489
    %v2506 = vadd.f32 %v2484, %v2489
    %v2507 = vld [vmem:[#allocation20] sm:$0xf]
    %v2508 = vld [vmem:[#allocation21] sm:$0x1]
    %v2510 = vlaneseq
    %v2511 = vshrl.u32 %v2510, 7
    %v2512 = vsub.s32 0, %v2511
    %v2513 = vrot.slane %v2508, %v2512
    %v2515 = vsel %vm884, %v279, 0
    %v2517 = vsel %vm884, %v280, 0
    %v2519 = vsel %vm884, %v281, 0
    %v2521 = vsel %vm884, %v282, 0
    %v2523 = vsel %vm884, %v283, 0
    %v2525 = vsel %vm884, %v284, 0
    %v2527 = vsel %vm884, %v285, 0
    %v2529 = vsel %vm884, %v286, 0
    %v2531 = vsel %vm884, %v287, 0
    %v2533 = vsel %vm884, %v288, 0
    %v2535 = vsel %vm884, %v289, 0
    %v2537 = vsel %vm884, %v290, 0
    %v2539 = vsel %vm884, %v291, 0
    %v2541 = vsel %vm884, %v292, 0
    %v2543 = vsel %vm884, %v293, 0
    %v2545 = vsel %vm884, %v294, 0
    %v2548 = vsel %vm1074, %v2507, 0
    %2550 = vmatprep.subr.mxu0 0.0
    %2551 = vmatpush1.msra.mxu0 %v2548
    %2552 = vmatprep.subr.mxu0 0.0
    %2553 = vmatpush1.msra.mxu0 0.0
    %2554 = vmatprep.subr.mxu0 0.0
    %2555 = vmatpush1.msra.mxu0 0.0
    %2556 = vmatprep.subr.mxu0 0.0
    %2557 = vmatpush1.msra.mxu0 0.0
    %2558 = vmatprep.subr.mxu0 0.0
    %2559 = vmatpush1.msra.mxu0 0.0
    %2560 = vmatprep.subr.mxu0 0.0
    %2561 = vmatpush1.msra.mxu0 0.0
    %2562 = vmatprep.subr.mxu0 0.0
    %2563 = vmatpush1.msra.mxu0 0.0
    %2564 = vmatprep.subr.mxu0 0.0
    %2565 = vmatpush1.msra.mxu0 0.0
    %2566 = vmatprep.subr.mxu0 0.0
    %2567 = vmatpush1.msra.mxu0 0.0
    %2568 = vmatprep.subr.mxu0 0.0
    %2569 = vmatpush1.msra.mxu0 0.0
    %2570 = vmatprep.subr.mxu0 0.0
    %2571 = vmatpush1.msra.mxu0 0.0
    %2572 = vmatprep.subr.mxu0 0.0
    %2573 = vmatpush1.msra.mxu0 0.0
    %2574 = vmatprep.subr.mxu0 0.0
    %2575 = vmatpush1.msra.mxu0 0.0
    %2576 = vmatprep.subr.mxu0 0.0
    %2577 = vmatpush1.msra.mxu0 0.0
    %2578 = vmatprep.subr.mxu0 0.0
    %2579 = vmatpush1.msra.mxu0 0.0
    %2580 = vmatprep.subr.mxu0 0.0
    %2581 = vmatpush1.msra.mxu0 0.0
    %2582 = vmatprep.subr.mxu0 0.0
    %2583 = vmatpush1.msra.mxu0 0.0
    %2584 = vmatprep.subr.mxu0 0.0
    %2585 = vmatpush1.msra.mxu0 0.0
    %2586 = vmatprep.subr.mxu0 0.0
    %2587 = vmatpush1.msra.mxu0 0.0
    %2588 = vmatprep.subr.mxu0 0.0
    %2589 = vmatpush1.msra.mxu0 0.0
    %2590 = vmatprep.subr.mxu0 0.0
    %2591 = vmatpush1.msra.mxu0 0.0
    %2592 = vmatprep.subr.mxu0 0.0
    %2593 = vmatpush1.msra.mxu0 0.0
    %2594 = vmatprep.subr.mxu0 0.0
    %2595 = vmatpush1.msra.mxu0 0.0
    %2596 = vmatprep.subr.mxu0 0.0
    %2597 = vmatpush1.msra.mxu0 0.0
    %2598 = vmatprep.subr.mxu0 0.0
    %2599 = vmatpush1.msra.mxu0 0.0
    %2600 = vmatprep.subr.mxu0 0.0
    %2601 = vmatpush1.msra.mxu0 0.0
    %2602 = vmatprep.subr.mxu0 0.0
    %2603 = vmatpush1.msra.mxu0 0.0
    %2604 = vmatprep.subr.mxu0 0.0
    %2605 = vmatpush1.msra.mxu0 0.0
    %2606 = vmatprep.subr.mxu0 0.0
    %2607 = vmatpush1.msra.mxu0 0.0
    %2608 = vmatprep.subr.mxu0 0.0
    %2609 = vmatpush1.msra.mxu0 0.0
    %2610 = vmatprep.subr.mxu0 0.0
    %2611 = vmatpush1.msra.mxu0 0.0
    %2612 = vmatprep.subr.mxu0 0.0
    %2613 = vmatpush1.msra.mxu0 0.0
    %2614 = vmatprep.mubr.f32.mxu0 0.0
    %2615 = vmatmul.mubr.f32.gmra.mrb[0].mxu0 %v2515
    %v2616 = vpop.f32.mrb[0].mxu0
    %v2617 = vadd.f32 %v2513, %v2616
    %v2618 = vpop.f32.mrb[0].mxu0
    %2619 = vmatprep.mubr.f32.mxu0 0.0
    %2620 = vmatmul.mubr.f32.gmra.mrb[0].mxu0 %v2517
    %v2621 = vpop.f32.mrb[0].mxu0
    %v2622 = vadd.f32 %v2513, %v2621
    %v2623 = vpop.f32.mrb[0].mxu0
    %2624 = vmatprep.mubr.f32.mxu0 0.0
    %2625 = vmatmul.mubr.f32.gmra.mrb[0].mxu0 %v2519
    %v2626 = vpop.f32.mrb[0].mxu0
    %v2627 = vadd.f32 %v2513, %v2626
    %v2628 = vpop.f32.mrb[0].mxu0
    %2629 = vmatprep.mubr.f32.mxu0 0.0
    %2630 = vmatmul.mubr.f32.gmra.mrb[0].mxu0 %v2521
    %v2631 = vpop.f32.mrb[0].mxu0
    %v2632 = vadd.f32 %v2513, %v2631
    %v2633 = vpop.f32.mrb[0].mxu0
    %2634 = vmatprep.mubr.f32.mxu0 0.0
    %2635 = vmatmul.mubr.f32.gmra.mrb[0].mxu0 %v2523
    %v2636 = vpop.f32.mrb[0].mxu0
    %v2637 = vadd.f32 %v2513, %v2636
    %v2638 = vpop.f32.mrb[0].mxu0
    %2639 = vmatprep.mubr.f32.mxu0 0.0
    %2640 = vmatmul.mubr.f32.gmra.mrb[0].mxu0 %v2525
    %v2641 = vpop.f32.mrb[0].mxu0
    %v2642 = vadd.f32 %v2513, %v2641
    %v2643 = vpop.f32.mrb[0].mxu0
    %2644 = vmatprep.mubr.f32.mxu0 0.0
    %2645 = vmatmul.mubr.f32.gmra.mrb[0].mxu0 %v2527
    %v2646 = vpop.f32.mrb[0].mxu0
    %v2647 = vadd.f32 %v2513, %v2646
    %v2648 = vpop.f32.mrb[0].mxu0
    %2649 = vmatprep.mubr.f32.mxu0 0.0
    %2650 = vmatmul.mubr.f32.gmra.mrb[0].mxu0 %v2529
    %v2651 = vpop.f32.mrb[0].mxu0
    %v2652 = vadd.f32 %v2513, %v2651
    %v2653 = vpop.f32.mrb[0].mxu0
    %2654 = vmatprep.mubr.f32.mxu0 0.0
    %2655 = vmatmul.mubr.f32.gmra.mrb[0].mxu0 %v2531
    %v2656 = vpop.f32.mrb[0].mxu0
    %v2657 = vadd.f32 %v2513, %v2656
    %v2658 = vpop.f32.mrb[0].mxu0
    %2659 = vmatprep.mubr.f32.mxu0 0.0
    %2660 = vmatmul.mubr.f32.gmra.mrb[0].mxu0 %v2533
    %v2661 = vpop.f32.mrb[0].mxu0
    %v2662 = vadd.f32 %v2513, %v2661
    %v2663 = vpop.f32.mrb[0].mxu0
    %2664 = vmatprep.mubr.f32.mxu0 0.0
    %2665 = vmatmul.mubr.f32.gmra.mrb[0].mxu0 %v2535
    %v2666 = vpop.f32.mrb[0].mxu0
    %v2667 = vadd.f32 %v2513, %v2666
    %v2668 = vpop.f32.mrb[0].mxu0
    %2669 = vmatprep.mubr.f32.mxu0 0.0
    %2670 = vmatmul.mubr.f32.gmra.mrb[0].mxu0 %v2537
    %v2671 = vpop.f32.mrb[0].mxu0
    %v2672 = vadd.f32 %v2513, %v2671
    %v2673 = vpop.f32.mrb[0].mxu0
    %2674 = vmatprep.mubr.f32.mxu0 0.0
    %2675 = vmatmul.mubr.f32.gmra.mrb[0].mxu0 %v2539
    %v2676 = vpop.f32.mrb[0].mxu0
    %v2677 = vadd.f32 %v2513, %v2676
    %v2678 = vpop.f32.mrb[0].mxu0
    %2679 = vmatprep.mubr.f32.mxu0 0.0
    %2680 = vmatmul.mubr.f32.gmra.mrb[0].mxu0 %v2541
    %v2681 = vpop.f32.mrb[0].mxu0
    %v2682 = vadd.f32 %v2513, %v2681
    %v2683 = vpop.f32.mrb[0].mxu0
    %2684 = vmatprep.mubr.f32.mxu0 0.0
    %2685 = vmatmul.mubr.f32.gmra.mrb[0].mxu0 %v2543
    %v2686 = vpop.f32.mrb[0].mxu0
    %v2687 = vadd.f32 %v2513, %v2686
    %v2688 = vpop.f32.mrb[0].mxu0
    %2689 = vmatprep.mubr.f32.mxu0 0.0
    %2690 = vmatmul.mubr.f32.gmra.mrb[0].mxu0 %v2545
    %v2691 = vpop.f32.mrb[0].mxu0
    %v2692 = vadd.f32 %v2513, %v2691
    %v2693 = vpop.f32.mrb[0].mxu0
    %2694 = vdwg.mxu0
    %v2695 = vadd.f32 %v2491, %v2617
    %v2696 = vadd.f32 %v2492, %v2622
    %v2697 = vadd.f32 %v2493, %v2627
    %v2698 = vadd.f32 %v2494, %v2632
    %v2699 = vadd.f32 %v2495, %v2637
    %v2700 = vadd.f32 %v2496, %v2642
    %v2701 = vadd.f32 %v2497, %v2647
    %v2702 = vadd.f32 %v2498, %v2652
    %v2703 = vadd.f32 %v2499, %v2657
    %v2704 = vadd.f32 %v2500, %v2662
    %v2705 = vadd.f32 %v2501, %v2667
    %v2706 = vadd.f32 %v2502, %v2672
    %v2707 = vadd.f32 %v2503, %v2677
    %v2708 = vadd.f32 %v2504, %v2682
    %v2709 = vadd.f32 %v2505, %v2687
    %v2710 = vadd.f32 %v2506, %v2692
    %v2711 = vmax.f32 %v2695, 0.0
    %v2712 = vmax.f32 %v2696, 0.0
    %v2713 = vmax.f32 %v2697, 0.0
    %v2714 = vmax.f32 %v2698, 0.0
    %v2715 = vmax.f32 %v2699, 0.0
    %v2716 = vmax.f32 %v2700, 0.0
    %v2717 = vmax.f32 %v2701, 0.0
    %v2718 = vmax.f32 %v2702, 0.0
    %v2719 = vmax.f32 %v2703, 0.0
    %v2720 = vmax.f32 %v2704, 0.0
    %v2721 = vmax.f32 %v2705, 0.0
    %v2722 = vmax.f32 %v2706, 0.0
    %v2723 = vmax.f32 %v2707, 0.0
    %v2724 = vmax.f32 %v2708, 0.0
    %v2725 = vmax.f32 %v2709, 0.0
    %v2726 = vmax.f32 %v2710, 0.0
    %2727 = vst.msk [vmem:[#allocation23] sm:$0xff] %vm901, %v2711
    %2728 = vst.msk [vmem:[#allocation23 + $0x8] sm:$0xff] %vm901, %v2712
    %2729 = vst.msk [vmem:[#allocation23 + $0x10] sm:$0xff] %vm901, %v2713
    %2730 = vst.msk [vmem:[#allocation23 + $0x18] sm:$0xff] %vm901, %v2714
    %2731 = vst.msk [vmem:[#allocation23 + $0x20] sm:$0xff] %vm901, %v2715
    %2732 = vst.msk [vmem:[#allocation23 + $0x28] sm:$0xff] %vm901, %v2716
    %2733 = vst.msk [vmem:[#allocation23 + $0x30] sm:$0xff] %vm901, %v2717
    %2734 = vst.msk [vmem:[#allocation23 + $0x38] sm:$0xff] %vm901, %v2718
    %2735 = vst.msk [vmem:[#allocation23 + $0x40] sm:$0xff] %vm901, %v2719
    %2736 = vst.msk [vmem:[#allocation23 + $0x48] sm:$0xff] %vm901, %v2720
    %2737 = vst.msk [vmem:[#allocation23 + $0x50] sm:$0xff] %vm901, %v2721
    %2738 = vst.msk [vmem:[#allocation23 + $0x58] sm:$0xff] %vm901, %v2722
    %2739 = vst.msk [vmem:[#allocation23 + $0x60] sm:$0xff] %vm901, %v2723
    %2740 = vst.msk [vmem:[#allocation23 + $0x68] sm:$0xff] %vm901, %v2724
    %2741 = vst.msk [vmem:[#allocation23 + $0x70] sm:$0xff] %vm901, %v2725
    %2742 = vst.msk [vmem:[#allocation23 + $0x78] sm:$0xff] %vm901, %v2726
    // Predicated region
    $region98: #{tpu_custom_call.1} parent=1 // pred_check
      _
    $region99: #{tpu_custom_call.1} parent=1 // pred_check_branch
      %2744 = sbr.rel (0) target = $region101
    $region100: #{tpu_custom_call.1} parent=1 // pred_region
      %s2746 = ssub.s32 2048, 2048
      %2747 = vsyncadd [#allocation5], %s2746
      %s2748 = sshll.u32 [#allocation23], 4
      %s2749 = int_to_ptr.vmem [resolvable:$true] %s2748
      %2754 = dma.vmem_to_hbm [thread:$0]  %s2749, 2048, %s12, [#allocation5], 128, 128, 8
    $region101: #{tpu_custom_call.1} parent=1 // pred_fallthru
      _
    // Predicated region
    $region102: #{tpu_custom_call.1} parent=1 // pred_check
      _
    $region103: #{tpu_custom_call.1} parent=1 // pred_check_branch
      %2756 = sbr.rel (0) target = $region105
    $region104: #{tpu_custom_call.1} parent=1 // pred_region
      %2757 = dma.done [#allocation5], 2048
    $region105: #{tpu_custom_call.1} parent=1 // pred_fallthru
      _
    %2758 = vsyncpa [#allocation4], 1
    %2759 = vsyncpa [#allocation7], 1
    %2760 = vsyncpa [#allocation10], 1
    %2761 = vsyncpa [#allocation13], 1
    %2762 = vsyncpa [#allocation16], 1
    %2763 = vsyncpa [#allocation19], 1
    %2764 = vsyncpa [#allocation22], 1
    %2765 = vsyncpa [#allocation5], 1

</llo_original>
